<compile_context>
chip_gen: v7x
topology: tpu7x:2x2x1
jax: 0.10.0
libtpu: 0.0.40
codegen_flags: <defaults>
</compile_context>

<pallas_src>
import functools

import jax
import jax.numpy as jnp
from jax import lax
from jax.experimental import pallas as pl
from jax.experimental.pallas import tpu as pltpu


def _round_up(x, m):
    return ((x + m - 1) // m) * m


# ----------------------------------------------------------------------------
# Fused BasicBlock kernel (single pallas_call per block)
# ----------------------------------------------------------------------------
def _block_kernel(x_ref, mask_ref, w1_ref, b1_ref, w2_ref, b2_ref,
                  ws_ref, bs_ref, o_ref, y1g_ref, im_ref, *,
                  wp, guard, cin_p, cout_p, strided, identity):
    """conv3x3(stride) -> ReLU -> conv3x3(1) -> (+shortcut) -> ReLU, fully in VMEM.

    Layouts (flat padded grid (N, Hp, Wp), Lp = round_up(N*Hp*Wp, 128)):
      x_ref   stride==1: (Cin_p, G+Lp+G) bf16  guarded padded input (guards/ring zero)
              stride!=1: (9*Cin_p, Lp)  bf16  pre-strided conv1 taps (tap-major rows)
      mask_ref (1, Lp)   f32   1 at interior output positions, 0 at ring / lane tail
      w1_ref  (Cout_p, 9*Cin_p)  bf16   conv1 weights, taps folded into K
      b1_ref  (Cout_p, 1)        f32
      w2_ref  (Cout_p, 9*Cout_p) bf16   conv2 weights, taps folded into K
      b2_ref  (Cout_p, 1)        f32
      ws_ref  (Cout_p, Cin_p)    bf16   1x1 projection shortcut (unused if identity)
      bs_ref  (Cout_p, 1)        f32
      o_ref   (Cout_p, Lp)       bf16   block output on the output padded flat grid
      y1g_ref (Cout_p, G+Lp+G)   bf16   VMEM scratch: conv1 activation + guard zeros
      im_ref  (9*max(Cin_p,Cout_p), Lp) bf16  shared im2col scratch
    """
    lp = o_ref.shape[1]

    # ---- conv1: build im2col (K = 9*Cin_p) and issue ONE MXU dot ----------------
    if strided:
        im1 = x_ref[...]                              # wrapper-built tap stack
        centre = x_ref[4 * cin_p:5 * cin_p, :]        # == x sampled at stride s
    else:
        # Each 3x3 tap is a constant lane shift on the flat padded grid.
        for ky in range(3):
            for kx in range(3):
                t = ky * 3 + kx
                d = (ky - 1) * wp + (kx - 1)
                im_ref[t * cin_p:(t + 1) * cin_p, :] = \
                    x_ref[:, guard + d:guard + d + lp]
        im1 = im_ref[:9 * cin_p, :]
        centre = x_ref[:, guard:guard + lp]

    acc1 = jnp.dot(w1_ref[...], im1, preferred_element_type=jnp.float32)
    # Bias + ReLU in f32; the mask zeroes the padding ring / lane tail so conv2's
    # border taps read zeros (correct zero-padding semantics). Cast once to bf16.
    y1 = (jnp.maximum(acc1 + b1_ref[...], 0.0) * mask_ref[...]).astype(jnp.bfloat16)

    # Keep conv1's activation VMEM-resident in a guarded bf16 scratch; zero only the
    # guard regions (the interior [guard:guard+lp] is fully overwritten next).
    y1g_ref[:, :guard] = jnp.zeros((cout_p, guard), jnp.bfloat16)
    y1g_ref[:, guard + lp:] = jnp.zeros((cout_p, guard), jnp.bfloat16)
    y1g_ref[:, guard:guard + lp] = y1

    # ---- shortcut (f32 accumulation) --------------------------------------------
    if identity:
        # TODO(synk): identity residual is bf16-rounded (input was cast in the
        #             wrapper); pass an f32 residual if tighter f32 matching is needed.
        shortcut = centre.astype(jnp.float32)
    else:
        shortcut = jnp.dot(ws_ref[...], centre,
                           preferred_element_type=jnp.float32) + bs_ref[...]

    # ---- conv2: im2col from the guarded scratch (lane shifts), then ONE dot ------
    for ky in range(3):
        for kx in range(3):
            t = ky * 3 + kx
            d = (ky - 1) * wp + (kx - 1)
            im_ref[t * cout_p:(t + 1) * cout_p, :] = \
                y1g_ref[:, guard + d:guard + d + lp]
    acc2 = jnp.dot(w2_ref[...], im_ref[:9 * cout_p, :],
                   preferred_element_type=jnp.float32)

    # Bias + residual + ReLU; mask so the flat output directly feeds the next block.
    o_ref[...] = (jnp.maximum(acc2 + b2_ref[...] + shortcut, 0.0)
                  * mask_ref[...]).astype(o_ref.dtype)


# ----------------------------------------------------------------------------
# Wrapper glue (small plain-JAX layout prep; all conv math runs in the kernel)
# ----------------------------------------------------------------------------
def _interior_mask(n, hp, wp, lp):
    l = n * hp * wp
    m = jnp.zeros((n, hp, wp), jnp.float32).at[:, 1:-1, 1:-1].set(1.0)
    return jnp.pad(m.reshape(1, l), ((0, 0), (0, lp - l)))


def _nchw_to_flat(x):
    """(N,C,H,W) f32 -> bf16 (C_pad, Lp) on the zero-padded flat grid."""
    n, c, h, w = x.shape
    cp = _round_up(c, 8)
    hp, wp = h + 2, w + 2
    l = n * hp * wp
    lp = _round_up(l, 128)
    xpad = jnp.pad(x, ((0, 0), (0, cp - c), (1, 1), (1, 1)))
    flat = jnp.transpose(xpad, (1, 0, 2, 3)).reshape(cp, l)
    flat = jnp.pad(flat, ((0, 0), (0, lp - l))).astype(jnp.bfloat16)
    return flat, dict(n=n, c=c, h=h, w=w)


def _flat_to_nchw(flat, geom):
    n, c, h, w = geom["n"], geom["c"], geom["h"], geom["w"]
    hp, wp = h + 2, w + 2
    l = n * hp * wp
    out = flat[:c, :l].reshape(c, n, hp, wp)[:, :, 1:-1, 1:-1]
    return jnp.transpose(out, (1, 0, 2, 3)).astype(jnp.float32)


def _strided_taps_from_flat(flat, n, h, w, cin_p, stride):
    """Strided 3x3 tap stack (9*Cin_p, Lp_out) on the OUTPUT padded flat grid."""
    hp_i, wp_i = h + 2, w + 2
    l_i = n * hp_i * wp_i
    ho = (h - 1) // stride + 1
    wo = (w - 1) // stride + 1
    hp_o, wp_o = ho + 2, wo + 2
    l_o = n * hp_o * wp_o
    lp_o = _round_up(l_o, 128)
    # The flat grid already IS the 1-zero-padded input (ring zeros == conv padding).
    xg = flat[:, :l_i].reshape(cin_p, n, hp_i, wp_i)
    taps = []
    for ky in range(3):
        for kx in range(3):
            tap = xg[:, :, ky:ky + (ho - 1) * stride + 1:stride,
                           kx:kx + (wo - 1) * stride + 1:stride]       # (Cin_p,N,Ho,Wo)
            tap = jnp.pad(tap, ((0, 0), (0, 0), (1, 1), (1, 1)))       # output grid ring
            taps.append(tap.reshape(cin_p, l_o))
    xt = jnp.concatenate(taps, axis=0)                                 # tap-major rows
    return jnp.pad(xt, ((0, 0), (0, lp_o - l_o))), (ho, wo, hp_o, wp_o, l_o, lp_o)


def _pack_conv_weight(w_oihw, cin_p, cout_p):
    """PyTorch OIHW (Co,Ci,3,3) -> (Cout_p, 9*Cin_p), K index = (ky*3+kx)*Cin_p + c."""
    co, ci, kh, kw = w_oihw.shape
    wpad = jnp.pad(w_oihw, ((0, cout_p - co), (0, cin_p - ci), (0, 0), (0, 0)))
    return jnp.transpose(wpad, (0, 2, 3, 1)).reshape(cout_p, kh * kw * cin_p).astype(jnp.bfloat16)


def _pack_bias(b, cout_p):
    return jnp.pad(b, (0, cout_p - b.shape[0])).reshape(cout_p, 1).astype(jnp.float32)


def basic_block(flat, geom, params, stride):
    """One ResNet BasicBlock forward as a single fused pallas_call on the flat layout."""
    n, cin, h, w = geom["n"], geom["c"], geom["h"], geom["w"]
    cin_p = _round_up(cin, 8)
    cout = params["w1"].shape[0]                      # OIHW
    cout_p = _round_up(cout, 8)

    if stride == 1:
        ho, wo = h, w
        hp, wp = h + 2, w + 2
        l = n * hp * wp
        lp = _round_up(l, 128)
        guard = _round_up(wp + 1, 8)
        x_in = jnp.pad(flat, ((0, 0), (guard, guard)))   # guarded padded input
        strided = False
    else:
        x_in, (ho, wo, hp, wp, l, lp) = _strided_taps_from_flat(flat, n, h, w, cin_p, stride)
        guard = _round_up(wp + 1, 8)
        strided = True

    mask = _interior_mask(n, hp, wp, lp)
    identity = (stride == 1 and cin == cout)

    w1p = _pack_conv_weight(params["w1"], cin_p, cout_p)     # (Cout_p, 9*Cin_p)
    w2p = _pack_conv_weight(params["w2"], cout_p, cout_p)    # (Cout_p, 9*Cout_p)
    b1 = _pack_bias(params["b1"], cout_p)
    b2 = _pack_bias(params["b2"], cout_p)
    if identity:
        wsp = jnp.zeros((cout_p, cin_p), jnp.bfloat16)       # unused on identity path
        bs = jnp.zeros((cout_p, 1), jnp.float32)
    else:
        wsp = jnp.pad(params["ws"], ((0, cout_p - cout), (0, cin_p - cin))).astype(jnp.bfloat16)
        bs = _pack_bias(params["bs"], cout_p)

    kernel = functools.partial(_block_kernel, wp=wp, guard=guard,
                               cin_p=cin_p, cout_p=cout_p,
                               strided=strided, identity=identity)

    flops = 2 * lp * (9 * cin_p * cout_p + 9 * cout_p * cout_p
                      + (0 if identity else cin_p * cout_p))
    bytes_accessed = (x_in.size * 2 + mask.size * 4 + w1p.size * 2 + w2p.size * 2
                      + wsp.size * 2 + (b1.size + b2.size + bs.size) * 4
                      + cout_p * lp * 2)

    out = pl.pallas_call(
        kernel,
        out_shape=jax.ShapeDtypeStruct((cout_p, lp), jnp.bfloat16),
        scratch_shapes=[
            pltpu.VMEM((cout_p, guard + lp + guard), jnp.bfloat16),      # guarded y1
            pltpu.VMEM((9 * max(cin_p, cout_p), lp), jnp.bfloat16),      # shared im2col
        ],
        cost_estimate=pl.CostEstimate(flops=flops, transcendentals=0,
                                      bytes_accessed=bytes_accessed),
    )(x_in, mask, w1p, b1, w2p, b2, wsp, bs)

    return out, dict(n=n, c=cout, h=ho, w=wo)


def resnet_cnn_forward(x_nchw, layer_params, strides):
    flat, geom = _nchw_to_flat(x_nchw)          # convert once, stay flat between blocks
    for params, s in zip(layer_params, strides):
        flat, geom = basic_block(flat, geom, params, s)
    return _flat_to_nchw(flat, geom)


# ----------------------------------------------------------------------------
# Deterministic parameter init (PyTorch OIHW layout) and pure-JAX reference
# ----------------------------------------------------------------------------
def init_params(key, init_channel, out_channel, blockslayers):
    channels = [init_channel] + list(out_channel)
    params = []
    for i in range(blockslayers):
        cin, cout = channels[i], channels[i + 1]
        key, k1, k2, k3 = jax.random.split(key, 4)
        params.append({
            "w1": jax.random.normal(k1, (cout, cin, 3, 3), jnp.float32) * (2.0 / (9 * cin)) ** 0.5,
            "b1": jnp.zeros((cout,), jnp.float32),
            "w2": jax.random.normal(k2, (cout, cout, 3, 3), jnp.float32) * (2.0 / (9 * cout)) ** 0.5,
            "b2": jnp.zeros((cout,), jnp.float32),
            "ws": jax.random.normal(k3, (cout, cin), jnp.float32) * (2.0 / cin) ** 0.5,
            "bs": jnp.zeros((cout,), jnp.float32),
        })
    return params


def _ref_block(x, p, stride):
    dn = ("NCHW", "OIHW", "NCHW")
    y = lax.conv_general_dilated(x, p["w1"], (stride, stride), ((1, 1), (1, 1)),
                                 dimension_numbers=dn) + p["b1"][None, :, None, None]
    y = jnp.maximum(y, 0.0)
    y = lax.conv_general_dilated(y, p["w2"], (1, 1), ((1, 1), (1, 1)),
                                 dimension_numbers=dn) + p["b2"][None, :, None, None]
    if stride == 1 and p["w1"].shape[0] == p["w1"].shape[1]:
        sc = x
    else:
        sc = lax.conv_general_dilated(x, p["ws"][:, :, None, None], (stride, stride),
                                      ((0, 0), (0, 0)), dimension_numbers=dn) \
             + p["bs"][None, :, None, None]
    return jnp.maximum(y + sc, 0.0)


def resnet_cnn_reference(x, layer_params, strides):
    for p, s in zip(layer_params, strides):
        x = _ref_block(x, p, s)
    return x


if __name__ == "__main__":
    # Resnet_cnn(block=BasicBlock, init_channel=4, out_channel=[8, 16],
    #            blockslayers=2, stride=[1, 2]) on a (2, 4, 16, 16) NCHW input.
    init_channel = 4
    out_channel = [8, 16]
    blockslayers = 2
    strides = [1, 2]

    key = jax.random.PRNGKey(0)
    key, kx = jax.random.split(key)
    x = jax.random.normal(kx, (2, 4, 16, 16), jnp.float32)   # NCHW, like the torch module

    layer_params = init_params(key, init_channel, out_channel, blockslayers)

    fwd = jax.jit(lambda inp: resnet_cnn_forward(inp, layer_params, strides))
    out = fwd(x)
    jax.block_until_ready(out)

    assert out.shape == (2, 16, 8, 8), out.shape
    assert bool(jnp.all(jnp.isfinite(out)))

    # Loose tolerance: kernel uses bf16 MXU inputs / bf16 inter-block activations.
    ref = resnet_cnn_reference(x, layer_params, strides)
    max_diff = float(jnp.max(jnp.abs(out - ref)))
    assert max_diff < 0.3, f"max |kernel - reference| too large: {max_diff}"

    print("KERNEL_OK")
</pallas_src>

<mosaic_0001>
module attributes {stable_mosaic.version = 11 : i64} {
  func.func @_block_kernel(%arg0: memref<8x816xbf16, #tpu.memory_space<vmem>>, %arg1: memref<1x768xf32, #tpu.memory_space<vmem>>, %arg2: memref<8x72xbf16, #tpu.memory_space<vmem>>, %arg3: memref<8x1xf32, #tpu.memory_space<vmem>>, %arg4: memref<8x72xbf16, #tpu.memory_space<vmem>>, %arg5: memref<8x1xf32, #tpu.memory_space<vmem>>, %arg6: memref<8x8xbf16, #tpu.memory_space<vmem>>, %arg7: memref<8x1xf32, #tpu.memory_space<vmem>>, %arg8: memref<8x768xbf16, #tpu.memory_space<vmem>>, %arg9: memref<8x816xbf16, #tpu.memory_space<vmem>>, %arg10: memref<72x768xbf16, #tpu.memory_space<vmem>>) attributes {dimension_semantics = [], scalar_prefetch = 0 : i64, scratch_operands = 2 : i64, tpu.core_type = #tpu.core_type<tc>} {
    %c0 = arith.constant 0 : index
    %c5 = arith.constant 5 : index
    %0 = vector.load %arg0[%c0, %c5] : memref<8x816xbf16, #tpu.memory_space<vmem>>, vector<8x768xbf16>
    %c0_0 = arith.constant 0 : index
    %c0_1 = arith.constant 0 : index
    %1 = vector.load %arg10[%c0_0, %c0_1] : memref<72x768xbf16, #tpu.memory_space<vmem>>, vector<8x768xbf16>
    tpu.vector_store %arg10[%c0_0, %c0_1], %0 {strides = array<i32>} : memref<72x768xbf16, #tpu.memory_space<vmem>>, vector<8x768xbf16>,
    %c0_2 = arith.constant 0 : index
    %c6 = arith.constant 6 : index
    %2 = vector.load %arg0[%c0_2, %c6] : memref<8x816xbf16, #tpu.memory_space<vmem>>, vector<8x768xbf16>
    %c8 = arith.constant 8 : index
    %c0_3 = arith.constant 0 : index
    %3 = vector.load %arg10[%c8, %c0_3] : memref<72x768xbf16, #tpu.memory_space<vmem>>, vector<8x768xbf16>
    tpu.vector_store %arg10[%c8, %c0_3], %2 {strides = array<i32>} : memref<72x768xbf16, #tpu.memory_space<vmem>>, vector<8x768xbf16>,
    %c0_4 = arith.constant 0 : index
    %c7 = arith.constant 7 : index
    %4 = vector.load %arg0[%c0_4, %c7] : memref<8x816xbf16, #tpu.memory_space<vmem>>, vector<8x768xbf16>
    %c16 = arith.constant 16 : index
    %c0_5 = arith.constant 0 : index
    %5 = vector.load %arg10[%c16, %c0_5] : memref<72x768xbf16, #tpu.memory_space<vmem>>, vector<8x768xbf16>
    tpu.vector_store %arg10[%c16, %c0_5], %4 {strides = array<i32>} : memref<72x768xbf16, #tpu.memory_space<vmem>>, vector<8x768xbf16>,
    %c0_6 = arith.constant 0 : index
    %c23 = arith.constant 23 : index
    %6 = vector.load %arg0[%c0_6, %c23] : memref<8x816xbf16, #tpu.memory_space<vmem>>, vector<8x768xbf16>
    %c24 = arith.constant 24 : index
    %c0_7 = arith.constant 0 : index
    %7 = vector.load %arg10[%c24, %c0_7] : memref<72x768xbf16, #tpu.memory_space<vmem>>, vector<8x768xbf16>
    tpu.vector_store %arg10[%c24, %c0_7], %6 {strides = array<i32>} : memref<72x768xbf16, #tpu.memory_space<vmem>>, vector<8x768xbf16>,
    %c0_8 = arith.constant 0 : index
    %c24_9 = arith.constant 24 : index
    %8 = vector.load %arg0[%c0_8, %c24_9] : memref<8x816xbf16, #tpu.memory_space<vmem>>, vector<8x768xbf16>
    %c32 = arith.constant 32 : index
    %c0_10 = arith.constant 0 : index
    %9 = vector.load %arg10[%c32, %c0_10] : memref<72x768xbf16, #tpu.memory_space<vmem>>, vector<8x768xbf16>
    tpu.vector_store %arg10[%c32, %c0_10], %8 {strides = array<i32>} : memref<72x768xbf16, #tpu.memory_space<vmem>>, vector<8x768xbf16>,
    %c0_11 = arith.constant 0 : index
    %c25 = arith.constant 25 : index
    %10 = vector.load %arg0[%c0_11, %c25] : memref<8x816xbf16, #tpu.memory_space<vmem>>, vector<8x768xbf16>
    %c40 = arith.constant 40 : index
    %c0_12 = arith.constant 0 : index
    %11 = vector.load %arg10[%c40, %c0_12] : memref<72x768xbf16, #tpu.memory_space<vmem>>, vector<8x768xbf16>
    tpu.vector_store %arg10[%c40, %c0_12], %10 {strides = array<i32>} : memref<72x768xbf16, #tpu.memory_space<vmem>>, vector<8x768xbf16>,
    %c0_13 = arith.constant 0 : index
    %c41 = arith.constant 41 : index
    %12 = vector.load %arg0[%c0_13, %c41] : memref<8x816xbf16, #tpu.memory_space<vmem>>, vector<8x768xbf16>
    %c48 = arith.constant 48 : index
    %c0_14 = arith.constant 0 : index
    %13 = vector.load %arg10[%c48, %c0_14] : memref<72x768xbf16, #tpu.memory_space<vmem>>, vector<8x768xbf16>
    tpu.vector_store %arg10[%c48, %c0_14], %12 {strides = array<i32>} : memref<72x768xbf16, #tpu.memory_space<vmem>>, vector<8x768xbf16>,
    %c0_15 = arith.constant 0 : index
    %c42 = arith.constant 42 : index
    %14 = vector.load %arg0[%c0_15, %c42] : memref<8x816xbf16, #tpu.memory_space<vmem>>, vector<8x768xbf16>
    %c56 = arith.constant 56 : index
    %c0_16 = arith.constant 0 : index
    %15 = vector.load %arg10[%c56, %c0_16] : memref<72x768xbf16, #tpu.memory_space<vmem>>, vector<8x768xbf16>
    tpu.vector_store %arg10[%c56, %c0_16], %14 {strides = array<i32>} : memref<72x768xbf16, #tpu.memory_space<vmem>>, vector<8x768xbf16>,
    %c0_17 = arith.constant 0 : index
    %c43 = arith.constant 43 : index
    %16 = vector.load %arg0[%c0_17, %c43] : memref<8x816xbf16, #tpu.memory_space<vmem>>, vector<8x768xbf16>
    %c64 = arith.constant 64 : index
    %c0_18 = arith.constant 0 : index
    %17 = vector.load %arg10[%c64, %c0_18] : memref<72x768xbf16, #tpu.memory_space<vmem>>, vector<8x768xbf16>
    tpu.vector_store %arg10[%c64, %c0_18], %16 {strides = array<i32>} : memref<72x768xbf16, #tpu.memory_space<vmem>>, vector<8x768xbf16>,
    %c0_19 = arith.constant 0 : index
    %c0_20 = arith.constant 0 : index
    %18 = vector.load %arg10[%c0_19, %c0_20] : memref<72x768xbf16, #tpu.memory_space<vmem>>, vector<72x768xbf16>
    %c0_21 = arith.constant 0 : index
    %c24_22 = arith.constant 24 : index
    %19 = vector.load %arg0[%c0_21, %c24_22] : memref<8x816xbf16, #tpu.memory_space<vmem>>, vector<8x768xbf16>
    %c0_23 = arith.constant 0 : index
    %c0_24 = arith.constant 0 : index
    %20 = vector.load %arg2[%c0_23, %c0_24] : memref<8x72xbf16, #tpu.memory_space<vmem>>, vector<8x72xbf16>
    %cst = arith.constant dense<0.000000e+00> : vector<8x768xf32>
    %21 = tpu.matmul %20, %18, %cst {dimension_numbers = #tpu.dot_dimension_numbers<[1], [0], [0], [1], [0, 0, 1, 1], [], []>} : vector<8x72xbf16>, vector<72x768xbf16>, vector<8x768xf32> -> vector<8x768xf32>
    %c0_25 = arith.constant 0 : index
    %c0_26 = arith.constant 0 : index
    %22 = vector.load %arg3[%c0_25, %c0_26] : memref<8x1xf32, #tpu.memory_space<vmem>>, vector<8x1xf32>
    %23 = vector.broadcast %22 : vector<8x1xf32> to vector<8x768xf32>
    %24 = arith.addf %21, %23 : vector<8x768xf32>
    %cst_27 = arith.constant 0.000000e+00 : f32
    %25 = vector.broadcast %cst_27 : f32 to vector<8x768xf32>
    %26 = arith.maximumf %24, %25 : vector<8x768xf32>
    %c0_28 = arith.constant 0 : index
    %c0_29 = arith.constant 0 : index
    %27 = vector.load %arg1[%c0_28, %c0_29] : memref<1x768xf32, #tpu.memory_space<vmem>>, vector<1x768xf32>
    %28 = vector.broadcast %27 : vector<1x768xf32> to vector<8x768xf32>
    %29 = arith.mulf %26, %28 : vector<8x768xf32>
    %30 = arith.truncf %29 : vector<8x768xf32> to vector<8x768xbf16>
    %cst_30 = arith.constant 0.000000e+00 : bf16
    %31 = vector.broadcast %cst_30 : bf16 to vector<8x24xbf16>
    %c0_31 = arith.constant 0 : index
    %c0_32 = arith.constant 0 : index
    %32 = vector.load %arg9[%c0_31, %c0_32] : memref<8x816xbf16, #tpu.memory_space<vmem>>, vector<8x24xbf16>
    tpu.vector_store %arg9[%c0_31, %c0_32], %31 {strides = array<i32>} : memref<8x816xbf16, #tpu.memory_space<vmem>>, vector<8x24xbf16>,
    %cst_33 = arith.constant 0.000000e+00 : bf16
    %33 = vector.broadcast %cst_33 : bf16 to vector<8x24xbf16>
    %c0_34 = arith.constant 0 : index
    %c792 = arith.constant 792 : index
    %34 = vector.load %arg9[%c0_34, %c792] : memref<8x816xbf16, #tpu.memory_space<vmem>>, vector<8x24xbf16>
    tpu.vector_store %arg9[%c0_34, %c792], %33 {strides = array<i32>} : memref<8x816xbf16, #tpu.memory_space<vmem>>, vector<8x24xbf16>,
    %c0_35 = arith.constant 0 : index
    %c24_36 = arith.constant 24 : index
    %35 = vector.load %arg9[%c0_35, %c24_36] : memref<8x816xbf16, #tpu.memory_space<vmem>>, vector<8x768xbf16>
    tpu.vector_store %arg9[%c0_35, %c24_36], %30 {strides = array<i32>} : memref<8x816xbf16, #tpu.memory_space<vmem>>, vector<8x768xbf16>,
    %c0_37 = arith.constant 0 : index
    %c0_38 = arith.constant 0 : index
    %36 = vector.load %arg6[%c0_37, %c0_38] : memref<8x8xbf16, #tpu.memory_space<vmem>>, vector<8x8xbf16>
    %cst_39 = arith.constant dense<0.000000e+00> : vector<8x768xf32>
    %37 = tpu.matmul %36, %19, %cst_39 {dimension_numbers = #tpu.dot_dimension_numbers<[1], [0], [0], [1], [0, 0, 1, 1], [], []>} : vector<8x8xbf16>, vector<8x768xbf16>, vector<8x768xf32> -> vector<8x768xf32>
    %c0_40 = arith.constant 0 : index
    %c0_41 = arith.constant 0 : index
    %38 = vector.load %arg7[%c0_40, %c0_41] : memref<8x1xf32, #tpu.memory_space<vmem>>, vector<8x1xf32>
    %39 = vector.broadcast %38 : vector<8x1xf32> to vector<8x768xf32>
    %40 = arith.addf %37, %39 : vector<8x768xf32>
    %c0_42 = arith.constant 0 : index
    %c5_43 = arith.constant 5 : index
    %41 = vector.load %arg9[%c0_42, %c5_43] : memref<8x816xbf16, #tpu.memory_space<vmem>>, vector<8x768xbf16>
    %c0_44 = arith.constant 0 : index
    %c0_45 = arith.constant 0 : index
    %42 = vector.load %arg10[%c0_44, %c0_45] : memref<72x768xbf16, #tpu.memory_space<vmem>>, vector<8x768xbf16>
    tpu.vector_store %arg10[%c0_44, %c0_45], %41 {strides = array<i32>} : memref<72x768xbf16, #tpu.memory_space<vmem>>, vector<8x768xbf16>,
    %c0_46 = arith.constant 0 : index
    %c6_47 = arith.constant 6 : index
    %43 = vector.load %arg9[%c0_46, %c6_47] : memref<8x816xbf16, #tpu.memory_space<vmem>>, vector<8x768xbf16>
    %c8_48 = arith.constant 8 : index
    %c0_49 = arith.constant 0 : index
    %44 = vector.load %arg10[%c8_48, %c0_49] : memref<72x768xbf16, #tpu.memory_space<vmem>>, vector<8x768xbf16>
    tpu.vector_store %arg10[%c8_48, %c0_49], %43 {strides = array<i32>} : memref<72x768xbf16, #tpu.memory_space<vmem>>, vector<8x768xbf16>,
    %c0_50 = arith.constant 0 : index
    %c7_51 = arith.constant 7 : index
    %45 = vector.load %arg9[%c0_50, %c7_51] : memref<8x816xbf16, #tpu.memory_space<vmem>>, vector<8x768xbf16>
    %c16_52 = arith.constant 16 : index
    %c0_53 = arith.constant 0 : index
    %46 = vector.load %arg10[%c16_52, %c0_53] : memref<72x768xbf16, #tpu.memory_space<vmem>>, vector<8x768xbf16>
    tpu.vector_store %arg10[%c16_52, %c0_53], %45 {strides = array<i32>} : memref<72x768xbf16, #tpu.memory_space<vmem>>, vector<8x768xbf16>,
    %c0_54 = arith.constant 0 : index
    %c23_55 = arith.constant 23 : index
    %47 = vector.load %arg9[%c0_54, %c23_55] : memref<8x816xbf16, #tpu.memory_space<vmem>>, vector<8x768xbf16>
    %c24_56 = arith.constant 24 : index
    %c0_57 = arith.constant 0 : index
    %48 = vector.load %arg10[%c24_56, %c0_57] : memref<72x768xbf16, #tpu.memory_space<vmem>>, vector<8x768xbf16>
    tpu.vector_store %arg10[%c24_56, %c0_57], %47 {strides = array<i32>} : memref<72x768xbf16, #tpu.memory_space<vmem>>, vector<8x768xbf16>,
    %c0_58 = arith.constant 0 : index
    %c24_59 = arith.constant 24 : index
    %49 = vector.load %arg9[%c0_58, %c24_59] : memref<8x816xbf16, #tpu.memory_space<vmem>>, vector<8x768xbf16>
    %c32_60 = arith.constant 32 : index
    %c0_61 = arith.constant 0 : index
    %50 = vector.load %arg10[%c32_60, %c0_61] : memref<72x768xbf16, #tpu.memory_space<vmem>>, vector<8x768xbf16>
    tpu.vector_store %arg10[%c32_60, %c0_61], %49 {strides = array<i32>} : memref<72x768xbf16, #tpu.memory_space<vmem>>, vector<8x768xbf16>,
    %c0_62 = arith.constant 0 : index
    %c25_63 = arith.constant 25 : index
    %51 = vector.load %arg9[%c0_62, %c25_63] : memref<8x816xbf16, #tpu.memory_space<vmem>>, vector<8x768xbf16>
    %c40_64 = arith.constant 40 : index
    %c0_65 = arith.constant 0 : index
    %52 = vector.load %arg10[%c40_64, %c0_65] : memref<72x768xbf16, #tpu.memory_space<vmem>>, vector<8x768xbf16>
    tpu.vector_store %arg10[%c40_64, %c0_65], %51 {strides = array<i32>} : memref<72x768xbf16, #tpu.memory_space<vmem>>, vector<8x768xbf16>,
    %c0_66 = arith.constant 0 : index
    %c41_67 = arith.constant 41 : index
    %53 = vector.load %arg9[%c0_66, %c41_67] : memref<8x816xbf16, #tpu.memory_space<vmem>>, vector<8x768xbf16>
    %c48_68 = arith.constant 48 : index
    %c0_69 = arith.constant 0 : index
    %54 = vector.load %arg10[%c48_68, %c0_69] : memref<72x768xbf16, #tpu.memory_space<vmem>>, vector<8x768xbf16>
    tpu.vector_store %arg10[%c48_68, %c0_69], %53 {strides = array<i32>} : memref<72x768xbf16, #tpu.memory_space<vmem>>, vector<8x768xbf16>,
    %c0_70 = arith.constant 0 : index
    %c42_71 = arith.constant 42 : index
    %55 = vector.load %arg9[%c0_70, %c42_71] : memref<8x816xbf16, #tpu.memory_space<vmem>>, vector<8x768xbf16>
    %c56_72 = arith.constant 56 : index
    %c0_73 = arith.constant 0 : index
    %56 = vector.load %arg10[%c56_72, %c0_73] : memref<72x768xbf16, #tpu.memory_space<vmem>>, vector<8x768xbf16>
    tpu.vector_store %arg10[%c56_72, %c0_73], %55 {strides = array<i32>} : memref<72x768xbf16, #tpu.memory_space<vmem>>, vector<8x768xbf16>,
    %c0_74 = arith.constant 0 : index
    %c43_75 = arith.constant 43 : index
    %57 = vector.load %arg9[%c0_74, %c43_75] : memref<8x816xbf16, #tpu.memory_space<vmem>>, vector<8x768xbf16>
    %c64_76 = arith.constant 64 : index
    %c0_77 = arith.constant 0 : index
    %58 = vector.load %arg10[%c64_76, %c0_77] : memref<72x768xbf16, #tpu.memory_space<vmem>>, vector<8x768xbf16>
    tpu.vector_store %arg10[%c64_76, %c0_77], %57 {strides = array<i32>} : memref<72x768xbf16, #tpu.memory_space<vmem>>, vector<8x768xbf16>,
    %c0_78 = arith.constant 0 : index
    %c0_79 = arith.constant 0 : index
    %59 = vector.load %arg4[%c0_78, %c0_79] : memref<8x72xbf16, #tpu.memory_space<vmem>>, vector<8x72xbf16>
    %c0_80 = arith.constant 0 : index
    %c0_81 = arith.constant 0 : index
    %60 = vector.load %arg10[%c0_80, %c0_81] : memref<72x768xbf16, #tpu.memory_space<vmem>>, vector<72x768xbf16>
    %cst_82 = arith.constant dense<0.000000e+00> : vector<8x768xf32>
    %61 = tpu.matmul %59, %60, %cst_82 {dimension_numbers = #tpu.dot_dimension_numbers<[1], [0], [0], [1], [0, 0, 1, 1], [], []>} : vector<8x72xbf16>, vector<72x768xbf16>, vector<8x768xf32> -> vector<8x768xf32>
    %c0_83 = arith.constant 0 : index
    %c0_84 = arith.constant 0 : index
    %62 = vector.load %arg5[%c0_83, %c0_84] : memref<8x1xf32, #tpu.memory_space<vmem>>, vector<8x1xf32>
    %63 = vector.broadcast %62 : vector<8x1xf32> to vector<8x768xf32>
    %64 = arith.addf %61, %63 : vector<8x768xf32>
    %65 = arith.addf %64, %40 : vector<8x768xf32>
    %cst_85 = arith.constant 0.000000e+00 : f32
    %66 = vector.broadcast %cst_85 : f32 to vector<8x768xf32>
    %67 = arith.maximumf %65, %66 : vector<8x768xf32>
    %c0_86 = arith.constant 0 : index
    %c0_87 = arith.constant 0 : index
    %68 = vector.load %arg1[%c0_86, %c0_87] : memref<1x768xf32, #tpu.memory_space<vmem>>, vector<1x768xf32>
    %69 = vector.broadcast %68 : vector<1x768xf32> to vector<8x768xf32>
    %70 = arith.mulf %67, %69 : vector<8x768xf32>
    %71 = arith.truncf %70 : vector<8x768xf32> to vector<8x768xbf16>
    %c0_88 = arith.constant 0 : index
    %c0_89 = arith.constant 0 : index
    %72 = vector.load %arg8[%c0_88, %c0_89] : memref<8x768xbf16, #tpu.memory_space<vmem>>, vector<8x768xbf16>
    tpu.vector_store %arg8[%c0_88, %c0_89], %71 {strides = array<i32>} : memref<8x768xbf16, #tpu.memory_space<vmem>>, vector<8x768xbf16>,
    return
  }
}

module attributes {stable_mosaic.version = 11 : i64} {
  func.func @_block_kernel(%arg0: memref<72x256xbf16, #tpu.memory_space<vmem>>, %arg1: memref<1x256xf32, #tpu.memory_space<vmem>>, %arg2: memref<16x72xbf16, #tpu.memory_space<vmem>>, %arg3: memref<16x1xf32, #tpu.memory_space<vmem>>, %arg4: memref<16x144xbf16, #tpu.memory_space<vmem>>, %arg5: memref<16x1xf32, #tpu.memory_space<vmem>>, %arg6: memref<16x8xbf16, #tpu.memory_space<vmem>>, %arg7: memref<16x1xf32, #tpu.memory_space<vmem>>, %arg8: memref<16x256xbf16, #tpu.memory_space<vmem>>, %arg9: memref<16x288xbf16, #tpu.memory_space<vmem>>, %arg10: memref<144x256xbf16, #tpu.memory_space<vmem>>) attributes {dimension_semantics = [], scalar_prefetch = 0 : i64, scratch_operands = 2 : i64, tpu.core_type = #tpu.core_type<tc>} {
    %c0 = arith.constant 0 : index
    %c0_0 = arith.constant 0 : index
    %0 = vector.load %arg0[%c0, %c0_0] : memref<72x256xbf16, #tpu.memory_space<vmem>>, vector<72x256xbf16>
    %c32 = arith.constant 32 : index
    %c0_1 = arith.constant 0 : index
    %1 = vector.load %arg0[%c32, %c0_1] : memref<72x256xbf16, #tpu.memory_space<vmem>>, vector<8x256xbf16>
    %c0_2 = arith.constant 0 : index
    %c0_3 = arith.constant 0 : index
    %2 = vector.load %arg2[%c0_2, %c0_3] : memref<16x72xbf16, #tpu.memory_space<vmem>>, vector<16x72xbf16>
    %cst = arith.constant dense<0.000000e+00> : vector<16x256xf32>
    %3 = tpu.matmul %2, %0, %cst {dimension_numbers = #tpu.dot_dimension_numbers<[1], [0], [0], [1], [0, 0, 1, 1], [], []>} : vector<16x72xbf16>, vector<72x256xbf16>, vector<16x256xf32> -> vector<16x256xf32>
    %c0_4 = arith.constant 0 : index
    %c0_5 = arith.constant 0 : index
    %4 = vector.load %arg3[%c0_4, %c0_5] : memref<16x1xf32, #tpu.memory_space<vmem>>, vector<16x1xf32>
    %5 = vector.broadcast %4 : vector<16x1xf32> to vector<16x256xf32>
    %6 = arith.addf %3, %5 : vector<16x256xf32>
    %cst_6 = arith.constant 0.000000e+00 : f32
    %7 = vector.broadcast %cst_6 : f32 to vector<16x256xf32>
    %8 = arith.maximumf %6, %7 : vector<16x256xf32>
    %c0_7 = arith.constant 0 : index
    %c0_8 = arith.constant 0 : index
    %9 = vector.load %arg1[%c0_7, %c0_8] : memref<1x256xf32, #tpu.memory_space<vmem>>, vector<1x256xf32>
    %10 = vector.broadcast %9 : vector<1x256xf32> to vector<16x256xf32>
    %11 = arith.mulf %8, %10 : vector<16x256xf32>
    %12 = arith.truncf %11 : vector<16x256xf32> to vector<16x256xbf16>
    %cst_9 = arith.constant 0.000000e+00 : bf16
    %13 = vector.broadcast %cst_9 : bf16 to vector<16x16xbf16>
    %c0_10 = arith.constant 0 : index
    %c0_11 = arith.constant 0 : index
    %14 = vector.load %arg9[%c0_10, %c0_11] : memref<16x288xbf16, #tpu.memory_space<vmem>>, vector<16x16xbf16>
    tpu.vector_store %arg9[%c0_10, %c0_11], %13 {strides = array<i32>} : memref<16x288xbf16, #tpu.memory_space<vmem>>, vector<16x16xbf16>,
    %cst_12 = arith.constant 0.000000e+00 : bf16
    %15 = vector.broadcast %cst_12 : bf16 to vector<16x16xbf16>
    %c0_13 = arith.constant 0 : index
    %c272 = arith.constant 272 : index
    %16 = vector.load %arg9[%c0_13, %c272] : memref<16x288xbf16, #tpu.memory_space<vmem>>, vector<16x16xbf16>
    tpu.vector_store %arg9[%c0_13, %c272], %15 {strides = array<i32>} : memref<16x288xbf16, #tpu.memory_space<vmem>>, vector<16x16xbf16>,
    %c0_14 = arith.constant 0 : index
    %c16 = arith.constant 16 : index
    %17 = vector.load %arg9[%c0_14, %c16] : memref<16x288xbf16, #tpu.memory_space<vmem>>, vector<16x256xbf16>
    tpu.vector_store %arg9[%c0_14, %c16], %12 {strides = array<i32>} : memref<16x288xbf16, #tpu.memory_space<vmem>>, vector<16x256xbf16>,
    %c0_15 = arith.constant 0 : index
    %c0_16 = arith.constant 0 : index
    %18 = vector.load %arg6[%c0_15, %c0_16] : memref<16x8xbf16, #tpu.memory_space<vmem>>, vector<16x8xbf16>
    %cst_17 = arith.constant dense<0.000000e+00> : vector<16x256xf32>
    %19 = tpu.matmul %18, %1, %cst_17 {dimension_numbers = #tpu.dot_dimension_numbers<[1], [0], [0], [1], [0, 0, 1, 1], [], []>} : vector<16x8xbf16>, vector<8x256xbf16>, vector<16x256xf32> -> vector<16x256xf32>
    %c0_18 = arith.constant 0 : index
    %c0_19 = arith.constant 0 : index
    %20 = vector.load %arg7[%c0_18, %c0_19] : memref<16x1xf32, #tpu.memory_space<vmem>>, vector<16x1xf32>
    %21 = vector.broadcast %20 : vector<16x1xf32> to vector<16x256xf32>
    %22 = arith.addf %19, %21 : vector<16x256xf32>
    %c0_20 = arith.constant 0 : index
    %c5 = arith.constant 5 : index
    %23 = vector.load %arg9[%c0_20, %c5] : memref<16x288xbf16, #tpu.memory_space<vmem>>, vector<16x256xbf16>
    %c0_21 = arith.constant 0 : index
    %c0_22 = arith.constant 0 : index
    %24 = vector.load %arg10[%c0_21, %c0_22] : memref<144x256xbf16, #tpu.memory_space<vmem>>, vector<16x256xbf16>
    tpu.vector_store %arg10[%c0_21, %c0_22], %23 {strides = array<i32>} : memref<144x256xbf16, #tpu.memory_space<vmem>>, vector<16x256xbf16>,
    %c0_23 = arith.constant 0 : index
    %c6 = arith.constant 6 : index
    %25 = vector.load %arg9[%c0_23, %c6] : memref<16x288xbf16, #tpu.memory_space<vmem>>, vector<16x256xbf16>
    %c16_24 = arith.constant 16 : index
    %c0_25 = arith.constant 0 : index
    %26 = vector.load %arg10[%c16_24, %c0_25] : memref<144x256xbf16, #tpu.memory_space<vmem>>, vector<16x256xbf16>
    tpu.vector_store %arg10[%c16_24, %c0_25], %25 {strides = array<i32>} : memref<144x256xbf16, #tpu.memory_space<vmem>>, vector<16x256xbf16>,
    %c0_26 = arith.constant 0 : index
    %c7 = arith.constant 7 : index
    %27 = vector.load %arg9[%c0_26, %c7] : memref<16x288xbf16, #tpu.memory_space<vmem>>, vector<16x256xbf16>
    %c32_27 = arith.constant 32 : index
    %c0_28 = arith.constant 0 : index
    %28 = vector.load %arg10[%c32_27, %c0_28] : memref<144x256xbf16, #tpu.memory_space<vmem>>, vector<16x256xbf16>
    tpu.vector_store %arg10[%c32_27, %c0_28], %27 {strides = array<i32>} : memref<144x256xbf16, #tpu.memory_space<vmem>>, vector<16x256xbf16>,
    %c0_29 = arith.constant 0 : index
    %c15 = arith.constant 15 : index
    %29 = vector.load %arg9[%c0_29, %c15] : memref<16x288xbf16, #tpu.memory_space<vmem>>, vector<16x256xbf16>
    %c48 = arith.constant 48 : index
    %c0_30 = arith.constant 0 : index
    %30 = vector.load %arg10[%c48, %c0_30] : memref<144x256xbf16, #tpu.memory_space<vmem>>, vector<16x256xbf16>
    tpu.vector_store %arg10[%c48, %c0_30], %29 {strides = array<i32>} : memref<144x256xbf16, #tpu.memory_space<vmem>>, vector<16x256xbf16>,
    %c0_31 = arith.constant 0 : index
    %c16_32 = arith.constant 16 : index
    %31 = vector.load %arg9[%c0_31, %c16_32] : memref<16x288xbf16, #tpu.memory_space<vmem>>, vector<16x256xbf16>
    %c64 = arith.constant 64 : index
    %c0_33 = arith.constant 0 : index
    %32 = vector.load %arg10[%c64, %c0_33] : memref<144x256xbf16, #tpu.memory_space<vmem>>, vector<16x256xbf16>
    tpu.vector_store %arg10[%c64, %c0_33], %31 {strides = array<i32>} : memref<144x256xbf16, #tpu.memory_space<vmem>>, vector<16x256xbf16>,
    %c0_34 = arith.constant 0 : index
    %c17 = arith.constant 17 : index
    %33 = vector.load %arg9[%c0_34, %c17] : memref<16x288xbf16, #tpu.memory_space<vmem>>, vector<16x256xbf16>
    %c80 = arith.constant 80 : index
    %c0_35 = arith.constant 0 : index
    %34 = vector.load %arg10[%c80, %c0_35] : memref<144x256xbf16, #tpu.memory_space<vmem>>, vector<16x256xbf16>
    tpu.vector_store %arg10[%c80, %c0_35], %33 {strides = array<i32>} : memref<144x256xbf16, #tpu.memory_space<vmem>>, vector<16x256xbf16>,
    %c0_36 = arith.constant 0 : index
    %c25 = arith.constant 25 : index
    %35 = vector.load %arg9[%c0_36, %c25] : memref<16x288xbf16, #tpu.memory_space<vmem>>, vector<16x256xbf16>
    %c96 = arith.constant 96 : index
    %c0_37 = arith.constant 0 : index
    %36 = vector.load %arg10[%c96, %c0_37] : memref<144x256xbf16, #tpu.memory_space<vmem>>, vector<16x256xbf16>
    tpu.vector_store %arg10[%c96, %c0_37], %35 {strides = array<i32>} : memref<144x256xbf16, #tpu.memory_space<vmem>>, vector<16x256xbf16>,
    %c0_38 = arith.constant 0 : index
    %c26 = arith.constant 26 : index
    %37 = vector.load %arg9[%c0_38, %c26] : memref<16x288xbf16, #tpu.memory_space<vmem>>, vector<16x256xbf16>
    %c112 = arith.constant 112 : index
    %c0_39 = arith.constant 0 : index
    %38 = vector.load %arg10[%c112, %c0_39] : memref<144x256xbf16, #tpu.memory_space<vmem>>, vector<16x256xbf16>
    tpu.vector_store %arg10[%c112, %c0_39], %37 {strides = array<i32>} : memref<144x256xbf16, #tpu.memory_space<vmem>>, vector<16x256xbf16>,
    %c0_40 = arith.constant 0 : index
    %c27 = arith.constant 27 : index
    %39 = vector.load %arg9[%c0_40, %c27] : memref<16x288xbf16, #tpu.memory_space<vmem>>, vector<16x256xbf16>
    %c128 = arith.constant 128 : index
    %c0_41 = arith.constant 0 : index
    %40 = vector.load %arg10[%c128, %c0_41] : memref<144x256xbf16, #tpu.memory_space<vmem>>, vector<16x256xbf16>
    tpu.vector_store %arg10[%c128, %c0_41], %39 {strides = array<i32>} : memref<144x256xbf16, #tpu.memory_space<vmem>>, vector<16x256xbf16>,
    %c0_42 = arith.constant 0 : index
    %c0_43 = arith.constant 0 : index
    %41 = vector.load %arg4[%c0_42, %c0_43] : memref<16x144xbf16, #tpu.memory_space<vmem>>, vector<16x144xbf16>
    %c0_44 = arith.constant 0 : index
    %c0_45 = arith.constant 0 : index
    %42 = vector.load %arg10[%c0_44, %c0_45] : memref<144x256xbf16, #tpu.memory_space<vmem>>, vector<144x256xbf16>
    %cst_46 = arith.constant dense<0.000000e+00> : vector<16x256xf32>
    %43 = tpu.matmul %41, %42, %cst_46 {dimension_numbers = #tpu.dot_dimension_numbers<[1], [0], [0], [1], [0, 0, 1, 1], [], []>} : vector<16x144xbf16>, vector<144x256xbf16>, vector<16x256xf32> -> vector<16x256xf32>
    %c0_47 = arith.constant 0 : index
    %c0_48 = arith.constant 0 : index
    %44 = vector.load %arg5[%c0_47, %c0_48] : memref<16x1xf32, #tpu.memory_space<vmem>>, vector<16x1xf32>
    %45 = vector.broadcast %44 : vector<16x1xf32> to vector<16x256xf32>
    %46 = arith.addf %43, %45 : vector<16x256xf32>
    %47 = arith.addf %46, %22 : vector<16x256xf32>
    %cst_49 = arith.constant 0.000000e+00 : f32
    %48 = vector.broadcast %cst_49 : f32 to vector<16x256xf32>
    %49 = arith.maximumf %47, %48 : vector<16x256xf32>
    %c0_50 = arith.constant 0 : index
    %c0_51 = arith.constant 0 : index
    %50 = vector.load %arg1[%c0_50, %c0_51] : memref<1x256xf32, #tpu.memory_space<vmem>>, vector<1x256xf32>
    %51 = vector.broadcast %50 : vector<1x256xf32> to vector<16x256xf32>
    %52 = arith.mulf %49, %51 : vector<16x256xf32>
    %53 = arith.truncf %52 : vector<16x256xf32> to vector<16x256xbf16>
    %c0_52 = arith.constant 0 : index
    %c0_53 = arith.constant 0 : index
    %54 = vector.load %arg8[%c0_52, %c0_53] : memref<16x256xbf16, #tpu.memory_space<vmem>>, vector<16x256xbf16>
    tpu.vector_store %arg8[%c0_52, %c0_53], %53 {strides = array<i32>} : memref<16x256xbf16, #tpu.memory_space<vmem>>, vector<16x256xbf16>,
    return
  }
}

</mosaic_0001>

<llo_original>
// kernel: _lambda_.2
$region0: #{_lambda_.2}
  #allocation0 [shape = 'u32[]', space=smem, size = 0x4, offset = 0x4, fixed_abs, tag = 'smem constant byte address 0x4 - core index']
  #allocation1 [shape = 'u32[144,128]{1,0:T(1,128)}', space=vmem, size = 0x12000, scoped, tag = 'internal scratch']
  #allocation2 [shape = 'bf16[8,816]{1,0:T(8,128)(2,1)}', space=vmem, size = 0x3800, scoped, tag = 'scratch operand']
  #allocation3 [shape = 'bf16[72,768]{1,0:T(8,128)(2,1)}', space=vmem, size = 0x1b000, scoped, tag = 'scratch operand']
  %s0 = inlined_call_operand.vmem [shape: bf16[8,816], index: 0, kind: input, shape index: {}]
  %s1 = inlined_call_operand.vmem [shape: f32[1,768], index: 1, kind: input, shape index: {}]
  %s2 = inlined_call_operand.vmem [shape: bf16[8,72], index: 2, kind: input, shape index: {}]
  %s3 = inlined_call_operand.vmem [shape: f32[8,1], index: 3, kind: input, shape index: {}, may-alias: {3,5,7}]
  %s4 = inlined_call_operand.vmem [shape: bf16[8,72], index: 4, kind: input, shape index: {}]
  %s5 = inlined_call_operand.vmem [shape: f32[8,1], index: 5, kind: input, shape index: {}, may-alias: {3,5,7}]
  %s6 = inlined_call_operand.vmem [shape: bf16[8,8], index: 6, kind: input, shape index: {}]
  %s7 = inlined_call_operand.vmem [shape: f32[8,1], index: 7, kind: input, shape index: {}, may-alias: {3,5,7}]
  %s8 = inlined_call_operand.vmem [shape: bf16[8,768], index: 8, kind: output, shape index: {}]
  %s9 = sld [smem:[#allocation0]]
  $region42: #{_lambda_.2} parent=0
    _
  %s11 = ssub.s32 1, %s9
  %s12 = scalar_select 0, %s11, %s9
  // Predicated region
  $region2: #{_lambda_.2} parent=0 // pred_check
    _
  $region3: #{_lambda_.2} parent=0 // pred_check_branch
    %14 = sbr.rel (0) target = $region5
  $region4: #{_lambda_.2} parent=0 // pred_region
    _
  $region5: #{_lambda_.2} parent=0 // pred_fallthru
    _
  // Predicated region
  $region6: #{_lambda_.2} parent=0 // pred_check
    _
  $region7: #{_lambda_.2} parent=0 // pred_check_branch
    %16 = sbr.rel (0) target = $region9
  $region8: #{_lambda_.2} parent=0 // pred_region
    _
  $region9: #{_lambda_.2} parent=0 // pred_fallthru
    _
  // Predicated region
  $region10: #{_lambda_.2} parent=0 // pred_check
    _
  $region11: #{_lambda_.2} parent=0 // pred_check_branch
    %18 = sbr.rel (0) target = $region13
  $region12: #{_lambda_.2} parent=0 // pred_region
    _
  $region13: #{_lambda_.2} parent=0 // pred_fallthru
    _
  // Predicated region
  $region14: #{_lambda_.2} parent=0 // pred_check
    _
  $region15: #{_lambda_.2} parent=0 // pred_check_branch
    %20 = sbr.rel (0) target = $region17
  $region16: #{_lambda_.2} parent=0 // pred_region
    _
  $region17: #{_lambda_.2} parent=0 // pred_fallthru
    _
  // Predicated region
  $region18: #{_lambda_.2} parent=0 // pred_check
    _
  $region19: #{_lambda_.2} parent=0 // pred_check_branch
    %22 = sbr.rel (0) target = $region21
  $region20: #{_lambda_.2} parent=0 // pred_region
    _
  $region21: #{_lambda_.2} parent=0 // pred_fallthru
    _
  // Predicated region
  $region22: #{_lambda_.2} parent=0 // pred_check
    _
  $region23: #{_lambda_.2} parent=0 // pred_check_branch
    %24 = sbr.rel (0) target = $region25
  $region24: #{_lambda_.2} parent=0 // pred_region
    _
  $region25: #{_lambda_.2} parent=0 // pred_fallthru
    _
  // Predicated region
  $region26: #{_lambda_.2} parent=0 // pred_check
    _
  $region27: #{_lambda_.2} parent=0 // pred_check_branch
    %26 = sbr.rel (0) target = $region29
  $region28: #{_lambda_.2} parent=0 // pred_region
    _
  $region29: #{_lambda_.2} parent=0 // pred_fallthru
    _
  // Predicated region
  $region30: #{_lambda_.2} parent=0 // pred_check
    _
  $region31: #{_lambda_.2} parent=0 // pred_check_branch
    %28 = sbr.rel (0) target = $region33
  $region32: #{_lambda_.2} parent=0 // pred_region
    _
  $region33: #{_lambda_.2} parent=0 // pred_fallthru
    _
  %v30 = vld [vmem:[%s0] sm:$0xff]
  %v31 = vld [vmem:[%s0 + $0x8] sm:$0xff]
  %v32 = vld [vmem:[%s0 + $0x10] sm:$0xff]
  %v33 = vld [vmem:[%s0 + $0x18] sm:$0xf]
  %38 = vrot.lane.b32.xlu0 %v30, 123
  %v39 = vpop.permute.xlu0 %38
  %40 = vrot.lane.b32.xlu0 %v31, 123
  %v41 = vpop.permute.xlu0 %40
  %42 = vrot.lane.b32.xlu0 %v32, 123
  %v43 = vpop.permute.xlu0 %42
  %44 = vrot.lane.b32.xlu0 %v33, 123
  %v45 = vpop.permute.xlu0 %44
  %v46 = vrot.slane %v39, 4
  %v47 = vrot.slane %v41, 4
  %v48 = vrot.slane %v43, 4
  %v49 = vrot.slane %v45, 4
  %vm50 = vcmask 1043456
  %v51 = vsel %vm50, %v46, %v47
  %vm52 = vcmask 1006592
  %v53 = vsel %vm52, %v39, %v51
  %v54 = vsel %vm50, %v47, %v48
  %v55 = vsel %vm52, %v41, %v54
  %v56 = vsel %vm50, %v48, %v49
  %v57 = vsel %vm52, %v43, %v56
  %61 = vst [vmem:[#allocation3] sm:$0xff] %v53
  %62 = vst [vmem:[#allocation3 + $0x8] sm:$0xff] %v55
  %63 = vst [vmem:[#allocation3 + $0x10] sm:$0xff] %v57
  %v64 = vld [vmem:[%s0] sm:$0xff]
  %v65 = vld [vmem:[%s0 + $0x8] sm:$0xff]
  %v66 = vld [vmem:[%s0 + $0x10] sm:$0xff]
  %v67 = vld [vmem:[%s0 + $0x18] sm:$0xf]
  %72 = vrot.lane.b32.xlu0 %v64, 122
  %v73 = vpop.permute.xlu0 %72
  %74 = vrot.lane.b32.xlu0 %v65, 122
  %v75 = vpop.permute.xlu0 %74
  %76 = vrot.lane.b32.xlu0 %v66, 122
  %v77 = vpop.permute.xlu0 %76
  %78 = vrot.lane.b32.xlu0 %v67, 122
  %v79 = vpop.permute.xlu0 %78
  %v80 = vrot.slane %v73, 4
  %v81 = vrot.slane %v75, 4
  %v82 = vrot.slane %v77, 4
  %v83 = vrot.slane %v79, 4
  %v84 = vsel %vm50, %v80, %v81
  %vm85 = vcmask 998400
  %v86 = vsel %vm85, %v73, %v84
  %v87 = vsel %vm50, %v81, %v82
  %v88 = vsel %vm85, %v75, %v87
  %v89 = vsel %vm50, %v82, %v83
  %v90 = vsel %vm85, %v77, %v89
  %94 = vst [vmem:[#allocation3 + $0x18] sm:$0xff] %v86
  %95 = vst [vmem:[#allocation3 + $0x20] sm:$0xff] %v88
  %96 = vst [vmem:[#allocation3 + $0x28] sm:$0xff] %v90
  %v97 = vld [vmem:[%s0] sm:$0xff]
  %v98 = vld [vmem:[%s0 + $0x8] sm:$0xff]
  %v99 = vld [vmem:[%s0 + $0x10] sm:$0xff]
  %v100 = vld [vmem:[%s0 + $0x18] sm:$0xf]
  %105 = vrot.lane.b32.xlu0 %v97, 121
  %v106 = vpop.permute.xlu0 %105
  %107 = vrot.lane.b32.xlu0 %v98, 121
  %v108 = vpop.permute.xlu0 %107
  %109 = vrot.lane.b32.xlu0 %v99, 121
  %v110 = vpop.permute.xlu0 %109
  %111 = vrot.lane.b32.xlu0 %v100, 121
  %v112 = vpop.permute.xlu0 %111
  %v113 = vrot.slane %v106, 4
  %v114 = vrot.slane %v108, 4
  %v115 = vrot.slane %v110, 4
  %v116 = vrot.slane %v112, 4
  %v117 = vsel %vm50, %v113, %v114
  %vm118 = vcmask 990208
  %v119 = vsel %vm118, %v106, %v117
  %v120 = vsel %vm50, %v114, %v115
  %v121 = vsel %vm118, %v108, %v120
  %v122 = vsel %vm50, %v115, %v116
  %v123 = vsel %vm118, %v110, %v122
  %127 = vst [vmem:[#allocation3 + $0x30] sm:$0xff] %v119
  %128 = vst [vmem:[#allocation3 + $0x38] sm:$0xff] %v121
  %129 = vst [vmem:[#allocation3 + $0x40] sm:$0xff] %v123
  %v130 = vld [vmem:[%s0] sm:$0xff]
  %v131 = vld [vmem:[%s0 + $0x8] sm:$0xff]
  %v132 = vld [vmem:[%s0 + $0x10] sm:$0xff]
  %v133 = vld [vmem:[%s0 + $0x18] sm:$0xf]
  %138 = vrot.lane.b32.xlu0 %v130, 105
  %v139 = vpop.permute.xlu0 %138
  %140 = vrot.lane.b32.xlu0 %v131, 105
  %v141 = vpop.permute.xlu0 %140
  %142 = vrot.lane.b32.xlu0 %v132, 105
  %v143 = vpop.permute.xlu0 %142
  %144 = vrot.lane.b32.xlu0 %v133, 105
  %v145 = vpop.permute.xlu0 %144
  %v146 = vrot.slane %v139, 4
  %v147 = vrot.slane %v141, 4
  %v148 = vrot.slane %v143, 4
  %v149 = vrot.slane %v145, 4
  %v150 = vsel %vm50, %v146, %v147
  %vm151 = vcmask 859136
  %v152 = vsel %vm151, %v139, %v150
  %v153 = vsel %vm50, %v147, %v148
  %v154 = vsel %vm151, %v141, %v153
  %v155 = vsel %vm50, %v148, %v149
  %v156 = vsel %vm151, %v143, %v155
  %160 = vst [vmem:[#allocation3 + $0x48] sm:$0xff] %v152
  %161 = vst [vmem:[#allocation3 + $0x50] sm:$0xff] %v154
  %162 = vst [vmem:[#allocation3 + $0x58] sm:$0xff] %v156
  %v163 = vld [vmem:[%s0] sm:$0xff]
  %v164 = vld [vmem:[%s0 + $0x8] sm:$0xff]
  %v165 = vld [vmem:[%s0 + $0x10] sm:$0xff]
  %v166 = vld [vmem:[%s0 + $0x18] sm:$0xf]
  %171 = vrot.lane.b32.xlu0 %v163, 104
  %v172 = vpop.permute.xlu0 %171
  %173 = vrot.lane.b32.xlu0 %v164, 104
  %v174 = vpop.permute.xlu0 %173
  %175 = vrot.lane.b32.xlu0 %v165, 104
  %v176 = vpop.permute.xlu0 %175
  %177 = vrot.lane.b32.xlu0 %v166, 104
  %v178 = vpop.permute.xlu0 %177
  %v179 = vrot.slane %v172, 4
  %v180 = vrot.slane %v174, 4
  %v181 = vrot.slane %v176, 4
  %v182 = vrot.slane %v178, 4
  %v183 = vsel %vm50, %v179, %v180
  %vm184 = vcmask 850944
  %v185 = vsel %vm184, %v172, %v183
  %v186 = vsel %vm50, %v180, %v181
  %v187 = vsel %vm184, %v174, %v186
  %v188 = vsel %vm50, %v181, %v182
  %v189 = vsel %vm184, %v176, %v188
  %193 = vst [vmem:[#allocation3 + $0x60] sm:$0xff] %v185
  %194 = vst [vmem:[#allocation3 + $0x68] sm:$0xff] %v187
  %195 = vst [vmem:[#allocation3 + $0x70] sm:$0xff] %v189
  %v196 = vld [vmem:[%s0] sm:$0xff]
  %v197 = vld [vmem:[%s0 + $0x8] sm:$0xff]
  %v198 = vld [vmem:[%s0 + $0x10] sm:$0xff]
  %v199 = vld [vmem:[%s0 + $0x18] sm:$0xf]
  %204 = vrot.lane.b32.xlu0 %v196, 103
  %v205 = vpop.permute.xlu0 %204
  %206 = vrot.lane.b32.xlu0 %v197, 103
  %v207 = vpop.permute.xlu0 %206
  %208 = vrot.lane.b32.xlu0 %v198, 103
  %v209 = vpop.permute.xlu0 %208
  %210 = vrot.lane.b32.xlu0 %v199, 103
  %v211 = vpop.permute.xlu0 %210
  %v212 = vrot.slane %v205, 4
  %v213 = vrot.slane %v207, 4
  %v214 = vrot.slane %v209, 4
  %v215 = vrot.slane %v211, 4
  %v216 = vsel %vm50, %v212, %v213
  %vm217 = vcmask 842752
  %v218 = vsel %vm217, %v205, %v216
  %v219 = vsel %vm50, %v213, %v214
  %v220 = vsel %vm217, %v207, %v219
  %v221 = vsel %vm50, %v214, %v215
  %v222 = vsel %vm217, %v209, %v221
  %226 = vst [vmem:[#allocation3 + $0x78] sm:$0xff] %v218
  %227 = vst [vmem:[#allocation3 + $0x80] sm:$0xff] %v220
  %228 = vst [vmem:[#allocation3 + $0x88] sm:$0xff] %v222
  %v229 = vld [vmem:[%s0] sm:$0xff]
  %v230 = vld [vmem:[%s0 + $0x8] sm:$0xff]
  %v231 = vld [vmem:[%s0 + $0x10] sm:$0xff]
  %v232 = vld [vmem:[%s0 + $0x18] sm:$0xf]
  %237 = vrot.lane.b32.xlu0 %v229, 87
  %v238 = vpop.permute.xlu0 %237
  %239 = vrot.lane.b32.xlu0 %v230, 87
  %v240 = vpop.permute.xlu0 %239
  %241 = vrot.lane.b32.xlu0 %v231, 87
  %v242 = vpop.permute.xlu0 %241
  %243 = vrot.lane.b32.xlu0 %v232, 87
  %v244 = vpop.permute.xlu0 %243
  %v245 = vrot.slane %v238, 4
  %v246 = vrot.slane %v240, 4
  %v247 = vrot.slane %v242, 4
  %v248 = vrot.slane %v244, 4
  %v249 = vsel %vm50, %v245, %v246
  %vm250 = vcmask 711680
  %v251 = vsel %vm250, %v238, %v249
  %v252 = vsel %vm50, %v246, %v247
  %v253 = vsel %vm250, %v240, %v252
  %v254 = vsel %vm50, %v247, %v248
  %v255 = vsel %vm250, %v242, %v254
  %259 = vst [vmem:[#allocation3 + $0x90] sm:$0xff] %v251
  %260 = vst [vmem:[#allocation3 + $0x98] sm:$0xff] %v253
  %261 = vst [vmem:[#allocation3 + $0xa0] sm:$0xff] %v255
  %v262 = vld [vmem:[%s0] sm:$0xff]
  %v263 = vld [vmem:[%s0 + $0x8] sm:$0xff]
  %v264 = vld [vmem:[%s0 + $0x10] sm:$0xff]
  %v265 = vld [vmem:[%s0 + $0x18] sm:$0xf]
  %270 = vrot.lane.b32.xlu0 %v262, 86
  %v271 = vpop.permute.xlu0 %270
  %272 = vrot.lane.b32.xlu0 %v263, 86
  %v273 = vpop.permute.xlu0 %272
  %274 = vrot.lane.b32.xlu0 %v264, 86
  %v275 = vpop.permute.xlu0 %274
  %276 = vrot.lane.b32.xlu0 %v265, 86
  %v277 = vpop.permute.xlu0 %276
  %v278 = vrot.slane %v271, 4
  %v279 = vrot.slane %v273, 4
  %v280 = vrot.slane %v275, 4
  %v281 = vrot.slane %v277, 4
  %v282 = vsel %vm50, %v278, %v279
  %vm283 = vcmask 703488
  %v284 = vsel %vm283, %v271, %v282
  %v285 = vsel %vm50, %v279, %v280
  %v286 = vsel %vm283, %v273, %v285
  %v287 = vsel %vm50, %v280, %v281
  %v288 = vsel %vm283, %v275, %v287
  %292 = vst [vmem:[#allocation3 + $0xa8] sm:$0xff] %v284
  %293 = vst [vmem:[#allocation3 + $0xb0] sm:$0xff] %v286
  %294 = vst [vmem:[#allocation3 + $0xb8] sm:$0xff] %v288
  %v295 = vld [vmem:[%s0] sm:$0xff]
  %v296 = vld [vmem:[%s0 + $0x8] sm:$0xff]
  %v297 = vld [vmem:[%s0 + $0x10] sm:$0xff]
  %v298 = vld [vmem:[%s0 + $0x18] sm:$0xf]
  %303 = vrot.lane.b32.xlu0 %v295, 85
  %v304 = vpop.permute.xlu0 %303
  %305 = vrot.lane.b32.xlu0 %v296, 85
  %v306 = vpop.permute.xlu0 %305
  %307 = vrot.lane.b32.xlu0 %v297, 85
  %v308 = vpop.permute.xlu0 %307
  %309 = vrot.lane.b32.xlu0 %v298, 85
  %v310 = vpop.permute.xlu0 %309
  %v311 = vrot.slane %v304, 4
  %v312 = vrot.slane %v306, 4
  %v313 = vrot.slane %v308, 4
  %v314 = vrot.slane %v310, 4
  %v315 = vsel %vm50, %v311, %v312
  %vm316 = vcmask 695296
  %v317 = vsel %vm316, %v304, %v315
  %v318 = vsel %vm50, %v312, %v313
  %v319 = vsel %vm316, %v306, %v318
  %v320 = vsel %vm50, %v313, %v314
  %v321 = vsel %vm316, %v308, %v320
  %325 = vst [vmem:[#allocation3 + $0xc0] sm:$0xff] %v317
  %326 = vst [vmem:[#allocation3 + $0xc8] sm:$0xff] %v319
  %327 = vst [vmem:[#allocation3 + $0xd0] sm:$0xff] %v321
  %v328 = vld [vmem:[#allocation3] sm:$0xff]
  %v329 = vld [vmem:[#allocation3 + $0x8] sm:$0xff]
  %v330 = vld [vmem:[#allocation3 + $0x10] sm:$0xff]
  %v331 = vld [vmem:[#allocation3 + $0x18] sm:$0xff]
  %v332 = vld [vmem:[#allocation3 + $0x20] sm:$0xff]
  %v333 = vld [vmem:[#allocation3 + $0x28] sm:$0xff]
  %v334 = vld [vmem:[#allocation3 + $0x30] sm:$0xff]
  %v335 = vld [vmem:[#allocation3 + $0x38] sm:$0xff]
  %v336 = vld [vmem:[#allocation3 + $0x40] sm:$0xff]
  %v337 = vld [vmem:[#allocation3 + $0x48] sm:$0xff]
  %v338 = vld [vmem:[#allocation3 + $0x50] sm:$0xff]
  %v339 = vld [vmem:[#allocation3 + $0x58] sm:$0xff]
  %v340 = vld [vmem:[#allocation3 + $0x60] sm:$0xff]
  %v341 = vld [vmem:[#allocation3 + $0x68] sm:$0xff]
  %v342 = vld [vmem:[#allocation3 + $0x70] sm:$0xff]
  %v343 = vld [vmem:[#allocation3 + $0x78] sm:$0xff]
  %v344 = vld [vmem:[#allocation3 + $0x80] sm:$0xff]
  %v345 = vld [vmem:[#allocation3 + $0x88] sm:$0xff]
  %v346 = vld [vmem:[#allocation3 + $0x90] sm:$0xff]
  %v347 = vld [vmem:[#allocation3 + $0x98] sm:$0xff]
  %v348 = vld [vmem:[#allocation3 + $0xa0] sm:$0xff]
  %v349 = vld [vmem:[#allocation3 + $0xa8] sm:$0xff]
  %v350 = vld [vmem:[#allocation3 + $0xb0] sm:$0xff]
  %v351 = vld [vmem:[#allocation3 + $0xb8] sm:$0xff]
  %v352 = vld [vmem:[#allocation3 + $0xc0] sm:$0xff]
  %v353 = vld [vmem:[#allocation3 + $0xc8] sm:$0xff]
  %v354 = vld [vmem:[#allocation3 + $0xd0] sm:$0xff]
  %v355 = vld [vmem:[%s0] sm:$0xff]
  %v356 = vld [vmem:[%s0 + $0x8] sm:$0xff]
  %v357 = vld [vmem:[%s0 + $0x10] sm:$0xff]
  %v358 = vld [vmem:[%s0 + $0x18] sm:$0xf]
  %v359 = vld [vmem:[%s2] sm:$0xf]
  %v360 = vld [vmem:[%s3] sm:$0xff]
  %362 = vset.pattern.permute.xlu0 0
  %363 = vperm.xlu0 %362, %v360
  %v364 = vpop.permute.xlu0 %363
  %v393 = vunpack.c.l.b16 %v328
  %v394 = vunpack.c.h.b16 %v328
  %v395 = vunpack.c.l.b16 %v329
  %v396 = vunpack.c.h.b16 %v329
  %v397 = vunpack.c.l.b16 %v330
  %v398 = vunpack.c.h.b16 %v330
  %v399 = vunpack.c.l.b16 %v331
  %v400 = vunpack.c.h.b16 %v331
  %v401 = vunpack.c.l.b16 %v332
  %v402 = vunpack.c.h.b16 %v332
  %v403 = vunpack.c.l.b16 %v333
  %v404 = vunpack.c.h.b16 %v333
  %v405 = vunpack.c.l.b16 %v334
  %v406 = vunpack.c.h.b16 %v334
  %v407 = vunpack.c.l.b16 %v335
  %v408 = vunpack.c.h.b16 %v335
  %v409 = vunpack.c.l.b16 %v336
  %v410 = vunpack.c.h.b16 %v336
  %v411 = vunpack.c.l.b16 %v337
  %v412 = vunpack.c.h.b16 %v337
  %v413 = vunpack.c.l.b16 %v338
  %v414 = vunpack.c.h.b16 %v338
  %v415 = vunpack.c.l.b16 %v339
  %v416 = vunpack.c.h.b16 %v339
  %v417 = vunpack.c.l.b16 %v340
  %v418 = vunpack.c.h.b16 %v340
  %v419 = vunpack.c.l.b16 %v341
  %v420 = vunpack.c.h.b16 %v341
  %v421 = vunpack.c.l.b16 %v342
  %v422 = vunpack.c.h.b16 %v342
  %v423 = vunpack.c.l.b16 %v343
  %v424 = vunpack.c.h.b16 %v343
  %v425 = vunpack.c.l.b16 %v344
  %v426 = vunpack.c.h.b16 %v344
  %v427 = vunpack.c.l.b16 %v345
  %v428 = vunpack.c.h.b16 %v345
  %v429 = vunpack.c.l.b16 %v346
  %v430 = vunpack.c.h.b16 %v346
  %v431 = vunpack.c.l.b16 %v347
  %v432 = vunpack.c.h.b16 %v347
  %v433 = vunpack.c.l.b16 %v348
  %v434 = vunpack.c.h.b16 %v348
  %v435 = vunpack.c.l.b16 %v349
  %v436 = vunpack.c.h.b16 %v349
  %v437 = vunpack.c.l.b16 %v350
  %v438 = vunpack.c.h.b16 %v350
  %v439 = vunpack.c.l.b16 %v351
  %v440 = vunpack.c.h.b16 %v351
  %v441 = vunpack.c.l.b16 %v352
  %v442 = vunpack.c.h.b16 %v352
  %v443 = vunpack.c.l.b16 %v353
  %v444 = vunpack.c.h.b16 %v353
  %v445 = vunpack.c.l.b16 %v354
  %v446 = vunpack.c.h.b16 %v354
  %v447 = vpack.c.b16 %v399, %v393
  %v448 = vpack.c.b16 %v400, %v394
  %v449 = vpack.c.b16 %v401, %v395
  %v450 = vpack.c.b16 %v402, %v396
  %v451 = vpack.c.b16 %v403, %v397
  %v452 = vpack.c.b16 %v404, %v398
  %v453 = vpack.c.b16 %v411, %v405
  %v454 = vpack.c.b16 %v412, %v406
  %v455 = vpack.c.b16 %v413, %v407
  %v456 = vpack.c.b16 %v414, %v408
  %v457 = vpack.c.b16 %v415, %v409
  %v458 = vpack.c.b16 %v416, %v410
  %v459 = vpack.c.b16 %v423, %v417
  %v460 = vpack.c.b16 %v424, %v418
  %v461 = vpack.c.b16 %v425, %v419
  %v462 = vpack.c.b16 %v426, %v420
  %v463 = vpack.c.b16 %v427, %v421
  %v464 = vpack.c.b16 %v428, %v422
  %v465 = vpack.c.b16 %v435, %v429
  %v466 = vpack.c.b16 %v436, %v430
  %v467 = vpack.c.b16 %v437, %v431
  %v468 = vpack.c.b16 %v438, %v432
  %v469 = vpack.c.b16 %v439, %v433
  %v470 = vpack.c.b16 %v440, %v434
  %v471 = vpack.c.b16 %v441, %v441
  %v472 = vpack.c.b16 %v442, %v442
  %v473 = vpack.c.b16 %v443, %v443
  %v474 = vpack.c.b16 %v444, %v444
  %v475 = vpack.c.b16 %v445, %v445
  %v476 = vpack.c.b16 %v446, %v446
  %vm501 = vcmask 588800
  %v503 = vsel %vm501, %v359, 0
  %vm505 = vcmask 1043456
  %v507 = vsel %vm505, %v471, 0
  %v510 = vsel %vm505, %v472, 0
  %v513 = vsel %vm505, %v473, 0
  %v516 = vsel %vm505, %v474, 0
  %v519 = vsel %vm505, %v475, 0
  %v522 = vsel %vm505, %v476, 0
  %524 = vmatprep.subr.bf16.mxu0 %v448
  %525 = vmatpush1.bf16.msra.mxu0 %v447
  %526 = vmatprep.subr.bf16.mxu0 %v454
  %527 = vmatpush1.bf16.msra.mxu0 %v453
  %528 = vmatprep.subr.bf16.mxu0 %v460
  %529 = vmatpush1.bf16.msra.mxu0 %v459
  %530 = vmatprep.subr.bf16.mxu0 %v466
  %531 = vmatpush1.bf16.msra.mxu0 %v465
  %532 = vmatprep.subr.bf16.mxu0 %v510
  %533 = vmatpush1.bf16.msra.mxu0 %v507
  %534 = vmatprep.subr.bf16.mxu0 0
  %535 = vmatpush1.bf16.msra.mxu0 0
  %536 = vmatprep.subr.bf16.mxu0 0
  %537 = vmatpush1.bf16.msra.mxu0 0
  %538 = vmatprep.subr.bf16.mxu0 0
  %539 = vmatpush1.bf16.msra.mxu0 0
  %540 = vmatprep.subr.bf16.mxu0 0
  %541 = vmatpush1.bf16.msra.mxu0 0
  %542 = vmatprep.subr.bf16.mxu0 0
  %543 = vmatpush1.bf16.msra.mxu0 0
  %544 = vmatprep.subr.bf16.mxu0 0
  %545 = vmatpush1.bf16.msra.mxu0 0
  %546 = vmatprep.subr.bf16.mxu0 0
  %547 = vmatpush1.bf16.msra.mxu0 0
  %548 = vmatprep.subr.bf16.mxu0 0
  %549 = vmatpush1.bf16.msra.mxu0 0
  %550 = vmatprep.subr.bf16.mxu0 0
  %551 = vmatpush1.bf16.msra.mxu0 0
  %552 = vmatprep.subr.bf16.mxu0 0
  %553 = vmatpush1.bf16.msra.mxu0 0
  %554 = vmatprep.subr.bf16.mxu0 0
  %555 = vmatpush1.bf16.msra.mxu0 0
  %556 = vmatprep.mubr.bf16.mxu0 0
  %557 = vmatmul.mubr.bf16.gmra.mrb[0].mxu0 %v503
  %v558 = vpop.f32.mrb[0].mxu0
  %v559 = vadd.f32 %v364, %v558
  %v560 = vpop.f32.mrb[0].mxu0
  %v561 = vadd.f32 %v364, %v560
  %v562 = vpop.f32.mrb[0].mxu0
  %v563 = vpop.f32.mrb[0].mxu0
  %564 = vdwg.mxu0
  %565 = vmatprep.subr.bf16.mxu0 %v450
  %566 = vmatpush1.bf16.msra.mxu0 %v449
  %567 = vmatprep.subr.bf16.mxu0 %v456
  %568 = vmatpush1.bf16.msra.mxu0 %v455
  %569 = vmatprep.subr.bf16.mxu0 %v462
  %570 = vmatpush1.bf16.msra.mxu0 %v461
  %571 = vmatprep.subr.bf16.mxu0 %v468
  %572 = vmatpush1.bf16.msra.mxu0 %v467
  %573 = vmatprep.subr.bf16.mxu0 %v516
  %574 = vmatpush1.bf16.msra.mxu0 %v513
  %575 = vmatprep.subr.bf16.mxu0 0
  %576 = vmatpush1.bf16.msra.mxu0 0
  %577 = vmatprep.subr.bf16.mxu0 0
  %578 = vmatpush1.bf16.msra.mxu0 0
  %579 = vmatprep.subr.bf16.mxu0 0
  %580 = vmatpush1.bf16.msra.mxu0 0
  %581 = vmatprep.subr.bf16.mxu0 0
  %582 = vmatpush1.bf16.msra.mxu0 0
  %583 = vmatprep.subr.bf16.mxu0 0
  %584 = vmatpush1.bf16.msra.mxu0 0
  %585 = vmatprep.subr.bf16.mxu0 0
  %586 = vmatpush1.bf16.msra.mxu0 0
  %587 = vmatprep.subr.bf16.mxu0 0
  %588 = vmatpush1.bf16.msra.mxu0 0
  %589 = vmatprep.subr.bf16.mxu0 0
  %590 = vmatpush1.bf16.msra.mxu0 0
  %591 = vmatprep.subr.bf16.mxu0 0
  %592 = vmatpush1.bf16.msra.mxu0 0
  %593 = vmatprep.subr.bf16.mxu0 0
  %594 = vmatpush1.bf16.msra.mxu0 0
  %595 = vmatprep.subr.bf16.mxu0 0
  %596 = vmatpush1.bf16.msra.mxu0 0
  %597 = vmatprep.mubr.bf16.mxu0 0
  %598 = vmatmul.mubr.bf16.gmra.mrb[0].mxu0 %v503
  %v599 = vpop.f32.mrb[0].mxu0
  %v600 = vadd.f32 %v364, %v599
  %v601 = vpop.f32.mrb[0].mxu0
  %v602 = vadd.f32 %v364, %v601
  %v603 = vpop.f32.mrb[0].mxu0
  %v604 = vpop.f32.mrb[0].mxu0
  %605 = vdwg.mxu0
  %606 = vmatprep.subr.bf16.mxu0 %v452
  %607 = vmatpush1.bf16.msra.mxu0 %v451
  %608 = vmatprep.subr.bf16.mxu0 %v458
  %609 = vmatpush1.bf16.msra.mxu0 %v457
  %610 = vmatprep.subr.bf16.mxu0 %v464
  %611 = vmatpush1.bf16.msra.mxu0 %v463
  %612 = vmatprep.subr.bf16.mxu0 %v470
  %613 = vmatpush1.bf16.msra.mxu0 %v469
  %614 = vmatprep.subr.bf16.mxu0 %v522
  %615 = vmatpush1.bf16.msra.mxu0 %v519
  %616 = vmatprep.subr.bf16.mxu0 0
  %617 = vmatpush1.bf16.msra.mxu0 0
  %618 = vmatprep.subr.bf16.mxu0 0
  %619 = vmatpush1.bf16.msra.mxu0 0
  %620 = vmatprep.subr.bf16.mxu0 0
  %621 = vmatpush1.bf16.msra.mxu0 0
  %622 = vmatprep.subr.bf16.mxu0 0
  %623 = vmatpush1.bf16.msra.mxu0 0
  %624 = vmatprep.subr.bf16.mxu0 0
  %625 = vmatpush1.bf16.msra.mxu0 0
  %626 = vmatprep.subr.bf16.mxu0 0
  %627 = vmatpush1.bf16.msra.mxu0 0
  %628 = vmatprep.subr.bf16.mxu0 0
  %629 = vmatpush1.bf16.msra.mxu0 0
  %630 = vmatprep.subr.bf16.mxu0 0
  %631 = vmatpush1.bf16.msra.mxu0 0
  %632 = vmatprep.subr.bf16.mxu0 0
  %633 = vmatpush1.bf16.msra.mxu0 0
  %634 = vmatprep.subr.bf16.mxu0 0
  %635 = vmatpush1.bf16.msra.mxu0 0
  %636 = vmatprep.subr.bf16.mxu0 0
  %637 = vmatpush1.bf16.msra.mxu0 0
  %638 = vmatprep.mubr.bf16.mxu0 0
  %639 = vmatmul.mubr.bf16.gmra.mrb[0].mxu0 %v503
  %v640 = vpop.f32.mrb[0].mxu0
  %v641 = vadd.f32 %v364, %v640
  %v642 = vpop.f32.mrb[0].mxu0
  %v643 = vadd.f32 %v364, %v642
  %v644 = vpop.f32.mrb[0].mxu0
  %v645 = vpop.f32.mrb[0].mxu0
  %646 = vdwg.mxu0
  %v647 = vmax.f32 %v559, 0.0
  %v648 = vmax.f32 %v561, 0.0
  %v649 = vmax.f32 %v600, 0.0
  %v650 = vmax.f32 %v602, 0.0
  %v651 = vmax.f32 %v641, 0.0
  %v652 = vmax.f32 %v643, 0.0
  %v653 = vld [vmem:[%s1] sm:$0x3f]
  %v655 = vlaneseq
  %v656 = vshrl.u32 %v655, 7
  %v657 = vsub.s32 0, %v656
  %v658 = vrot.slane %v653, %v657
  %v659 = vlaneseq
  %v660 = vshrl.u32 %v659, 7
  %v661 = vsub.s32 1, %v660
  %v662 = vrot.slane %v653, %v661
  %v663 = vlaneseq
  %v664 = vshrl.u32 %v663, 7
  %v665 = vsub.s32 2, %v664
  %v666 = vrot.slane %v653, %v665
  %v667 = vlaneseq
  %v668 = vshrl.u32 %v667, 7
  %v669 = vsub.s32 3, %v668
  %v670 = vrot.slane %v653, %v669
  %v671 = vlaneseq
  %v672 = vshrl.u32 %v671, 7
  %v673 = vsub.s32 4, %v672
  %v674 = vrot.slane %v653, %v673
  %v675 = vlaneseq
  %v676 = vshrl.u32 %v675, 7
  %v677 = vsub.s32 5, %v676
  %v678 = vrot.slane %v653, %v677
  %v685 = vmul.f32 %v647, %v658
  %v686 = vmul.f32 %v648, %v662
  %v687 = vmul.f32 %v649, %v666
  %v688 = vmul.f32 %v650, %v670
  %v689 = vmul.f32 %v651, %v674
  %v690 = vmul.f32 %v652, %v678
  %v691 = vpack.c.bf16 %v685, %v685
  %v692 = vpack.c.bf16 %v686, %v686
  %v693 = vpack.c.bf16 %v687, %v687
  %v694 = vpack.c.bf16 %v688, %v688
  %v695 = vpack.c.bf16 %v689, %v689
  %v696 = vpack.c.bf16 %v690, %v690
  %vm697 = vcmask 191488
  %698 = vst.msk [vmem:[#allocation2] sm:$0xf] %vm697, 0
  %vm699 = vcmask 388288
  %700 = vst.msk [vmem:[#allocation2 + $0x18] sm:$0xf] %vm699, 0
  %v707 = vunpack.c.l.b16 %v691
  %v708 = vunpack.c.l.b16 %v692
  %v709 = vunpack.c.l.b16 %v693
  %v710 = vunpack.c.l.b16 %v694
  %v711 = vunpack.c.l.b16 %v695
  %v712 = vunpack.c.l.b16 %v696
  %v713 = vpack.c.b16 %v708, %v707
  %v714 = vpack.c.b16 %v710, %v709
  %v715 = vpack.c.b16 %v712, %v711
  %716 = vrot.lane.b32.xlu0 %v713, 24
  %v717 = vpop.permute.xlu0 %716
  %718 = vrot.lane.b32.xlu0 %v714, 24
  %v719 = vpop.permute.xlu0 %718
  %720 = vrot.lane.b32.xlu0 %v715, 24
  %v721 = vpop.permute.xlu0 %720
  %v722 = vrot.slane %v717, 4
  %v723 = vrot.slane %v719, 4
  %v724 = vrot.slane %v721, 4
  %vm725 = vcmask 195584
  %v726 = vsel %vm725, %v722, %v717
  %v727 = vsel %vm50, %v722, %v723
  %v728 = vsel %vm725, %v727, %v719
  %v729 = vsel %vm50, %v723, %v724
  %v730 = vsel %vm725, %v729, %v721
  %vm735 = vcmask 1043648
  %vm736 = vcmask 1047556
  %vm737 = vmor %vm736, %vm735
  %738 = vst.msk [vmem:[#allocation2] sm:$0xff] %vm737, %v726
  %739 = vst [vmem:[#allocation2 + $0x8] sm:$0xff] %v728
  %740 = vst [vmem:[#allocation2 + $0x10] sm:$0xff] %v730
  %741 = vst.msk [vmem:[#allocation2 + $0x18] sm:$0xf] %vm697, %v724
  %v742 = vld [vmem:[%s6] sm:$0xf]
  %v743 = vld [vmem:[%s7] sm:$0xff]
  %745 = vset.pattern.permute.xlu0 0
  %746 = vperm.xlu0 %745, %v743
  %v747 = vpop.permute.xlu0 %746
  %v753 = vunpack.c.l.b16 %v355
  %v754 = vunpack.c.h.b16 %v355
  %v755 = vunpack.c.l.b16 %v356
  %v756 = vunpack.c.h.b16 %v356
  %v757 = vunpack.c.l.b16 %v357
  %v758 = vunpack.c.h.b16 %v357
  %v759 = vunpack.c.l.b16 %v358
  %v760 = vpack.c.b16 %v753, %v753
  %v761 = vpack.c.b16 %v754, %v754
  %v762 = vpack.c.b16 %v755, %v755
  %v763 = vpack.c.b16 %v756, %v756
  %v764 = vpack.c.b16 %v757, %v757
  %v765 = vpack.c.b16 %v758, %v758
  %v766 = vpack.c.b16 %v759, %v759
  %767 = vrot.lane.b32.xlu0 %v760, 104
  %v768 = vpop.permute.xlu0 %767
  %769 = vrot.lane.b32.xlu0 %v761, 104
  %v770 = vpop.permute.xlu0 %769
  %771 = vrot.lane.b32.xlu0 %v762, 104
  %v772 = vpop.permute.xlu0 %771
  %773 = vrot.lane.b32.xlu0 %v763, 104
  %v774 = vpop.permute.xlu0 %773
  %775 = vrot.lane.b32.xlu0 %v764, 104
  %v776 = vpop.permute.xlu0 %775
  %777 = vrot.lane.b32.xlu0 %v765, 104
  %v778 = vpop.permute.xlu0 %777
  %779 = vrot.lane.b32.xlu0 %v766, 104
  %v780 = vpop.permute.xlu0 %779
  %v781 = vsel %vm184, %v768, %v770
  %v782 = vsel %vm184, %v770, %v772
  %v783 = vsel %vm184, %v772, %v774
  %v784 = vsel %vm184, %v774, %v776
  %v785 = vsel %vm184, %v776, %v778
  %v786 = vsel %vm184, %v778, %v780
  %vm787 = vcmask 64512
  %v789 = vsel %vm787, %v742, 0
  %v792 = vsel %vm505, %v781, 0
  %v795 = vsel %vm505, %v782, 0
  %v798 = vsel %vm505, %v783, 0
  %v801 = vsel %vm505, %v784, 0
  %v804 = vsel %vm505, %v785, 0
  %v807 = vsel %vm505, %v786, 0
  %809 = vmatprep.subr.bf16.mxu0 %v795
  %810 = vmatpush1.bf16.msra.mxu0 %v792
  %811 = vmatprep.subr.bf16.mxu0 0
  %812 = vmatpush1.bf16.msra.mxu0 0
  %813 = vmatprep.subr.bf16.mxu0 0
  %814 = vmatpush1.bf16.msra.mxu0 0
  %815 = vmatprep.subr.bf16.mxu0 0
  %816 = vmatpush1.bf16.msra.mxu0 0
  %817 = vmatprep.subr.bf16.mxu0 0
  %818 = vmatpush1.bf16.msra.mxu0 0
  %819 = vmatprep.subr.bf16.mxu0 0
  %820 = vmatpush1.bf16.msra.mxu0 0
  %821 = vmatprep.subr.bf16.mxu0 0
  %822 = vmatpush1.bf16.msra.mxu0 0
  %823 = vmatprep.subr.bf16.mxu0 0
  %824 = vmatpush1.bf16.msra.mxu0 0
  %825 = vmatprep.subr.bf16.mxu0 0
  %826 = vmatpush1.bf16.msra.mxu0 0
  %827 = vmatprep.subr.bf16.mxu0 0
  %828 = vmatpush1.bf16.msra.mxu0 0
  %829 = vmatprep.subr.bf16.mxu0 0
  %830 = vmatpush1.bf16.msra.mxu0 0
  %831 = vmatprep.subr.bf16.mxu0 0
  %832 = vmatpush1.bf16.msra.mxu0 0
  %833 = vmatprep.subr.bf16.mxu0 0
  %834 = vmatpush1.bf16.msra.mxu0 0
  %835 = vmatprep.subr.bf16.mxu0 0
  %836 = vmatpush1.bf16.msra.mxu0 0
  %837 = vmatprep.subr.bf16.mxu0 0
  %838 = vmatpush1.bf16.msra.mxu0 0
  %839 = vmatprep.subr.bf16.mxu0 0
  %840 = vmatpush1.bf16.msra.mxu0 0
  %841 = vmatprep.mubr.bf16.mxu0 0
  %842 = vmatmul.mubr.bf16.gmra.mrb[0].mxu0 %v789
  %v843 = vpop.f32.mrb[0].mxu0
  %v844 = vadd.f32 %v747, %v843
  %v845 = vpop.f32.mrb[0].mxu0
  %v846 = vadd.f32 %v747, %v845
  %v847 = vpop.f32.mrb[0].mxu0
  %v848 = vpop.f32.mrb[0].mxu0
  %849 = vdwg.mxu0
  %850 = vmatprep.subr.bf16.mxu0 %v801
  %851 = vmatpush1.bf16.msra.mxu0 %v798
  %852 = vmatprep.subr.bf16.mxu0 0
  %853 = vmatpush1.bf16.msra.mxu0 0
  %854 = vmatprep.subr.bf16.mxu0 0
  %855 = vmatpush1.bf16.msra.mxu0 0
  %856 = vmatprep.subr.bf16.mxu0 0
  %857 = vmatpush1.bf16.msra.mxu0 0
  %858 = vmatprep.subr.bf16.mxu0 0
  %859 = vmatpush1.bf16.msra.mxu0 0
  %860 = vmatprep.subr.bf16.mxu0 0
  %861 = vmatpush1.bf16.msra.mxu0 0
  %862 = vmatprep.subr.bf16.mxu0 0
  %863 = vmatpush1.bf16.msra.mxu0 0
  %864 = vmatprep.subr.bf16.mxu0 0
  %865 = vmatpush1.bf16.msra.mxu0 0
  %866 = vmatprep.subr.bf16.mxu0 0
  %867 = vmatpush1.bf16.msra.mxu0 0
  %868 = vmatprep.subr.bf16.mxu0 0
  %869 = vmatpush1.bf16.msra.mxu0 0
  %870 = vmatprep.subr.bf16.mxu0 0
  %871 = vmatpush1.bf16.msra.mxu0 0
  %872 = vmatprep.subr.bf16.mxu0 0
  %873 = vmatpush1.bf16.msra.mxu0 0
  %874 = vmatprep.subr.bf16.mxu0 0
  %875 = vmatpush1.bf16.msra.mxu0 0
  %876 = vmatprep.subr.bf16.mxu0 0
  %877 = vmatpush1.bf16.msra.mxu0 0
  %878 = vmatprep.subr.bf16.mxu0 0
  %879 = vmatpush1.bf16.msra.mxu0 0
  %880 = vmatprep.subr.bf16.mxu0 0
  %881 = vmatpush1.bf16.msra.mxu0 0
  %882 = vmatprep.mubr.bf16.mxu0 0
  %883 = vmatmul.mubr.bf16.gmra.mrb[0].mxu0 %v789
  %v884 = vpop.f32.mrb[0].mxu0
  %v885 = vadd.f32 %v747, %v884
  %v886 = vpop.f32.mrb[0].mxu0
  %v887 = vadd.f32 %v747, %v886
  %v888 = vpop.f32.mrb[0].mxu0
  %v889 = vpop.f32.mrb[0].mxu0
  %890 = vdwg.mxu0
  %891 = vmatprep.subr.bf16.mxu0 %v807
  %892 = vmatpush1.bf16.msra.mxu0 %v804
  %893 = vmatprep.subr.bf16.mxu0 0
  %894 = vmatpush1.bf16.msra.mxu0 0
  %895 = vmatprep.subr.bf16.mxu0 0
  %896 = vmatpush1.bf16.msra.mxu0 0
  %897 = vmatprep.subr.bf16.mxu0 0
  %898 = vmatpush1.bf16.msra.mxu0 0
  %899 = vmatprep.subr.bf16.mxu0 0
  %900 = vmatpush1.bf16.msra.mxu0 0
  %901 = vmatprep.subr.bf16.mxu0 0
  %902 = vmatpush1.bf16.msra.mxu0 0
  %903 = vmatprep.subr.bf16.mxu0 0
  %904 = vmatpush1.bf16.msra.mxu0 0
  %905 = vmatprep.subr.bf16.mxu0 0
  %906 = vmatpush1.bf16.msra.mxu0 0
  %907 = vmatprep.subr.bf16.mxu0 0
  %908 = vmatpush1.bf16.msra.mxu0 0
  %909 = vmatprep.subr.bf16.mxu0 0
  %910 = vmatpush1.bf16.msra.mxu0 0
  %911 = vmatprep.subr.bf16.mxu0 0
  %912 = vmatpush1.bf16.msra.mxu0 0
  %913 = vmatprep.subr.bf16.mxu0 0
  %914 = vmatpush1.bf16.msra.mxu0 0
  %915 = vmatprep.subr.bf16.mxu0 0
  %916 = vmatpush1.bf16.msra.mxu0 0
  %917 = vmatprep.subr.bf16.mxu0 0
  %918 = vmatpush1.bf16.msra.mxu0 0
  %919 = vmatprep.subr.bf16.mxu0 0
  %920 = vmatpush1.bf16.msra.mxu0 0
  %921 = vmatprep.subr.bf16.mxu0 0
  %922 = vmatpush1.bf16.msra.mxu0 0
  %923 = vmatprep.mubr.bf16.mxu0 0
  %924 = vmatmul.mubr.bf16.gmra.mrb[0].mxu0 %v789
  %v925 = vpop.f32.mrb[0].mxu0
  %v926 = vadd.f32 %v747, %v925
  %v927 = vpop.f32.mrb[0].mxu0
  %v928 = vadd.f32 %v747, %v927
  %v929 = vpop.f32.mrb[0].mxu0
  %v930 = vpop.f32.mrb[0].mxu0
  %931 = vdwg.mxu0
  %v932 = vld [vmem:[#allocation2] sm:$0xff]
  %v933 = vld [vmem:[#allocation2 + $0x8] sm:$0xff]
  %v934 = vld [vmem:[#allocation2 + $0x10] sm:$0xff]
  %v935 = vld [vmem:[#allocation2 + $0x18] sm:$0xf]
  %940 = vrot.lane.b32.xlu0 %v932, 123
  %v941 = vpop.permute.xlu0 %940
  %942 = vrot.lane.b32.xlu0 %v933, 123
  %v943 = vpop.permute.xlu0 %942
  %944 = vrot.lane.b32.xlu0 %v934, 123
  %v945 = vpop.permute.xlu0 %944
  %946 = vrot.lane.b32.xlu0 %v935, 123
  %v947 = vpop.permute.xlu0 %946
  %v948 = vrot.slane %v941, 4
  %v949 = vrot.slane %v943, 4
  %v950 = vrot.slane %v945, 4
  %v951 = vrot.slane %v947, 4
  %v952 = vsel %vm50, %v948, %v949
  %v953 = vsel %vm52, %v941, %v952
  %v954 = vsel %vm50, %v949, %v950
  %v955 = vsel %vm52, %v943, %v954
  %v956 = vsel %vm50, %v950, %v951
  %v957 = vsel %vm52, %v945, %v956
  %961 = vst [vmem:[#allocation3] sm:$0xff] %v953
  %962 = vst [vmem:[#allocation3 + $0x8] sm:$0xff] %v955
  %963 = vst [vmem:[#allocation3 + $0x10] sm:$0xff] %v957
  %v964 = vld [vmem:[#allocation2] sm:$0xff]
  %v965 = vld [vmem:[#allocation2 + $0x8] sm:$0xff]
  %v966 = vld [vmem:[#allocation2 + $0x10] sm:$0xff]
  %v967 = vld [vmem:[#allocation2 + $0x18] sm:$0xf]
  %972 = vrot.lane.b32.xlu0 %v964, 122
  %v973 = vpop.permute.xlu0 %972
  %974 = vrot.lane.b32.xlu0 %v965, 122
  %v975 = vpop.permute.xlu0 %974
  %976 = vrot.lane.b32.xlu0 %v966, 122
  %v977 = vpop.permute.xlu0 %976
  %978 = vrot.lane.b32.xlu0 %v967, 122
  %v979 = vpop.permute.xlu0 %978
  %v980 = vrot.slane %v973, 4
  %v981 = vrot.slane %v975, 4
  %v982 = vrot.slane %v977, 4
  %v983 = vrot.slane %v979, 4
  %v984 = vsel %vm50, %v980, %v981
  %v985 = vsel %vm85, %v973, %v984
  %v986 = vsel %vm50, %v981, %v982
  %v987 = vsel %vm85, %v975, %v986
  %v988 = vsel %vm50, %v982, %v983
  %v989 = vsel %vm85, %v977, %v988
  %993 = vst [vmem:[#allocation3 + $0x18] sm:$0xff] %v985
  %994 = vst [vmem:[#allocation3 + $0x20] sm:$0xff] %v987
  %995 = vst [vmem:[#allocation3 + $0x28] sm:$0xff] %v989
  %v996 = vld [vmem:[#allocation2] sm:$0xff]
  %v997 = vld [vmem:[#allocation2 + $0x8] sm:$0xff]
  %v998 = vld [vmem:[#allocation2 + $0x10] sm:$0xff]
  %v999 = vld [vmem:[#allocation2 + $0x18] sm:$0xf]
  %1004 = vrot.lane.b32.xlu0 %v996, 121
  %v1005 = vpop.permute.xlu0 %1004
  %1006 = vrot.lane.b32.xlu0 %v997, 121
  %v1007 = vpop.permute.xlu0 %1006
  %1008 = vrot.lane.b32.xlu0 %v998, 121
  %v1009 = vpop.permute.xlu0 %1008
  %1010 = vrot.lane.b32.xlu0 %v999, 121
  %v1011 = vpop.permute.xlu0 %1010
  %v1012 = vrot.slane %v1005, 4
  %v1013 = vrot.slane %v1007, 4
  %v1014 = vrot.slane %v1009, 4
  %v1015 = vrot.slane %v1011, 4
  %v1016 = vsel %vm50, %v1012, %v1013
  %v1017 = vsel %vm118, %v1005, %v1016
  %v1018 = vsel %vm50, %v1013, %v1014
  %v1019 = vsel %vm118, %v1007, %v1018
  %v1020 = vsel %vm50, %v1014, %v1015
  %v1021 = vsel %vm118, %v1009, %v1020
  %1025 = vst [vmem:[#allocation3 + $0x30] sm:$0xff] %v1017
  %1026 = vst [vmem:[#allocation3 + $0x38] sm:$0xff] %v1019
  %1027 = vst [vmem:[#allocation3 + $0x40] sm:$0xff] %v1021
  %v1028 = vld [vmem:[#allocation2] sm:$0xff]
  %v1029 = vld [vmem:[#allocation2 + $0x8] sm:$0xff]
  %v1030 = vld [vmem:[#allocation2 + $0x10] sm:$0xff]
  %v1031 = vld [vmem:[#allocation2 + $0x18] sm:$0xf]
  %1036 = vrot.lane.b32.xlu0 %v1028, 105
  %v1037 = vpop.permute.xlu0 %1036
  %1038 = vrot.lane.b32.xlu0 %v1029, 105
  %v1039 = vpop.permute.xlu0 %1038
  %1040 = vrot.lane.b32.xlu0 %v1030, 105
  %v1041 = vpop.permute.xlu0 %1040
  %1042 = vrot.lane.b32.xlu0 %v1031, 105
  %v1043 = vpop.permute.xlu0 %1042
  %v1044 = vrot.slane %v1037, 4
  %v1045 = vrot.slane %v1039, 4
  %v1046 = vrot.slane %v1041, 4
  %v1047 = vrot.slane %v1043, 4
  %v1048 = vsel %vm50, %v1044, %v1045
  %v1049 = vsel %vm151, %v1037, %v1048
  %v1050 = vsel %vm50, %v1045, %v1046
  %v1051 = vsel %vm151, %v1039, %v1050
  %v1052 = vsel %vm50, %v1046, %v1047
  %v1053 = vsel %vm151, %v1041, %v1052
  %1057 = vst [vmem:[#allocation3 + $0x48] sm:$0xff] %v1049
  %1058 = vst [vmem:[#allocation3 + $0x50] sm:$0xff] %v1051
  %1059 = vst [vmem:[#allocation3 + $0x58] sm:$0xff] %v1053
  %v1060 = vld [vmem:[#allocation2] sm:$0xff]
  %v1061 = vld [vmem:[#allocation2 + $0x8] sm:$0xff]
  %v1062 = vld [vmem:[#allocation2 + $0x10] sm:$0xff]
  %v1063 = vld [vmem:[#allocation2 + $0x18] sm:$0xf]
  %1068 = vrot.lane.b32.xlu0 %v1060, 104
  %v1069 = vpop.permute.xlu0 %1068
  %1070 = vrot.lane.b32.xlu0 %v1061, 104
  %v1071 = vpop.permute.xlu0 %1070
  %1072 = vrot.lane.b32.xlu0 %v1062, 104
  %v1073 = vpop.permute.xlu0 %1072
  %1074 = vrot.lane.b32.xlu0 %v1063, 104
  %v1075 = vpop.permute.xlu0 %1074
  %v1076 = vrot.slane %v1069, 4
  %v1077 = vrot.slane %v1071, 4
  %v1078 = vrot.slane %v1073, 4
  %v1079 = vrot.slane %v1075, 4
  %v1080 = vsel %vm50, %v1076, %v1077
  %v1081 = vsel %vm184, %v1069, %v1080
  %v1082 = vsel %vm50, %v1077, %v1078
  %v1083 = vsel %vm184, %v1071, %v1082
  %v1084 = vsel %vm50, %v1078, %v1079
  %v1085 = vsel %vm184, %v1073, %v1084
  %1089 = vst [vmem:[#allocation3 + $0x60] sm:$0xff] %v1081
  %1090 = vst [vmem:[#allocation3 + $0x68] sm:$0xff] %v1083
  %1091 = vst [vmem:[#allocation3 + $0x70] sm:$0xff] %v1085
  %v1092 = vld [vmem:[#allocation2] sm:$0xff]
  %v1093 = vld [vmem:[#allocation2 + $0x8] sm:$0xff]
  %v1094 = vld [vmem:[#allocation2 + $0x10] sm:$0xff]
  %v1095 = vld [vmem:[#allocation2 + $0x18] sm:$0xf]
  %1100 = vrot.lane.b32.xlu0 %v1092, 103
  %v1101 = vpop.permute.xlu0 %1100
  %1102 = vrot.lane.b32.xlu0 %v1093, 103
  %v1103 = vpop.permute.xlu0 %1102
  %1104 = vrot.lane.b32.xlu0 %v1094, 103
  %v1105 = vpop.permute.xlu0 %1104
  %1106 = vrot.lane.b32.xlu0 %v1095, 103
  %v1107 = vpop.permute.xlu0 %1106
  %v1108 = vrot.slane %v1101, 4
  %v1109 = vrot.slane %v1103, 4
  %v1110 = vrot.slane %v1105, 4
  %v1111 = vrot.slane %v1107, 4
  %v1112 = vsel %vm50, %v1108, %v1109
  %v1113 = vsel %vm217, %v1101, %v1112
  %v1114 = vsel %vm50, %v1109, %v1110
  %v1115 = vsel %vm217, %v1103, %v1114
  %v1116 = vsel %vm50, %v1110, %v1111
  %v1117 = vsel %vm217, %v1105, %v1116
  %1121 = vst [vmem:[#allocation3 + $0x78] sm:$0xff] %v1113
  %1122 = vst [vmem:[#allocation3 + $0x80] sm:$0xff] %v1115
  %1123 = vst [vmem:[#allocation3 + $0x88] sm:$0xff] %v1117
  %v1124 = vld [vmem:[#allocation2] sm:$0xff]
  %v1125 = vld [vmem:[#allocation2 + $0x8] sm:$0xff]
  %v1126 = vld [vmem:[#allocation2 + $0x10] sm:$0xff]
  %v1127 = vld [vmem:[#allocation2 + $0x18] sm:$0xf]
  %1132 = vrot.lane.b32.xlu0 %v1124, 87
  %v1133 = vpop.permute.xlu0 %1132
  %1134 = vrot.lane.b32.xlu0 %v1125, 87
  %v1135 = vpop.permute.xlu0 %1134
  %1136 = vrot.lane.b32.xlu0 %v1126, 87
  %v1137 = vpop.permute.xlu0 %1136
  %1138 = vrot.lane.b32.xlu0 %v1127, 87
  %v1139 = vpop.permute.xlu0 %1138
  %v1140 = vrot.slane %v1133, 4
  %v1141 = vrot.slane %v1135, 4
  %v1142 = vrot.slane %v1137, 4
  %v1143 = vrot.slane %v1139, 4
  %v1144 = vsel %vm50, %v1140, %v1141
  %v1145 = vsel %vm250, %v1133, %v1144
  %v1146 = vsel %vm50, %v1141, %v1142
  %v1147 = vsel %vm250, %v1135, %v1146
  %v1148 = vsel %vm50, %v1142, %v1143
  %v1149 = vsel %vm250, %v1137, %v1148
  %1153 = vst [vmem:[#allocation3 + $0x90] sm:$0xff] %v1145
  %1154 = vst [vmem:[#allocation3 + $0x98] sm:$0xff] %v1147
  %1155 = vst [vmem:[#allocation3 + $0xa0] sm:$0xff] %v1149
  %v1156 = vld [vmem:[#allocation2] sm:$0xff]
  %v1157 = vld [vmem:[#allocation2 + $0x8] sm:$0xff]
  %v1158 = vld [vmem:[#allocation2 + $0x10] sm:$0xff]
  %v1159 = vld [vmem:[#allocation2 + $0x18] sm:$0xf]
  %1164 = vrot.lane.b32.xlu0 %v1156, 86
  %v1165 = vpop.permute.xlu0 %1164
  %1166 = vrot.lane.b32.xlu0 %v1157, 86
  %v1167 = vpop.permute.xlu0 %1166
  %1168 = vrot.lane.b32.xlu0 %v1158, 86
  %v1169 = vpop.permute.xlu0 %1168
  %1170 = vrot.lane.b32.xlu0 %v1159, 86
  %v1171 = vpop.permute.xlu0 %1170
  %v1172 = vrot.slane %v1165, 4
  %v1173 = vrot.slane %v1167, 4
  %v1174 = vrot.slane %v1169, 4
  %v1175 = vrot.slane %v1171, 4
  %v1176 = vsel %vm50, %v1172, %v1173
  %v1177 = vsel %vm283, %v1165, %v1176
  %v1178 = vsel %vm50, %v1173, %v1174
  %v1179 = vsel %vm283, %v1167, %v1178
  %v1180 = vsel %vm50, %v1174, %v1175
  %v1181 = vsel %vm283, %v1169, %v1180
  %1185 = vst [vmem:[#allocation3 + $0xa8] sm:$0xff] %v1177
  %1186 = vst [vmem:[#allocation3 + $0xb0] sm:$0xff] %v1179
  %1187 = vst [vmem:[#allocation3 + $0xb8] sm:$0xff] %v1181
  %v1188 = vld [vmem:[#allocation2] sm:$0xff]
  %v1189 = vld [vmem:[#allocation2 + $0x8] sm:$0xff]
  %v1190 = vld [vmem:[#allocation2 + $0x10] sm:$0xff]
  %v1191 = vld [vmem:[#allocation2 + $0x18] sm:$0xf]
  %1196 = vrot.lane.b32.xlu0 %v1188, 85
  %v1197 = vpop.permute.xlu0 %1196
  %1198 = vrot.lane.b32.xlu0 %v1189, 85
  %v1199 = vpop.permute.xlu0 %1198
  %1200 = vrot.lane.b32.xlu0 %v1190, 85
  %v1201 = vpop.permute.xlu0 %1200
  %1202 = vrot.lane.b32.xlu0 %v1191, 85
  %v1203 = vpop.permute.xlu0 %1202
  %v1204 = vrot.slane %v1197, 4
  %v1205 = vrot.slane %v1199, 4
  %v1206 = vrot.slane %v1201, 4
  %v1207 = vrot.slane %v1203, 4
  %v1208 = vsel %vm50, %v1204, %v1205
  %v1209 = vsel %vm316, %v1197, %v1208
  %v1210 = vsel %vm50, %v1205, %v1206
  %v1211 = vsel %vm316, %v1199, %v1210
  %v1212 = vsel %vm50, %v1206, %v1207
  %v1213 = vsel %vm316, %v1201, %v1212
  %1217 = vst [vmem:[#allocation3 + $0xc0] sm:$0xff] %v1209
  %1218 = vst [vmem:[#allocation3 + $0xc8] sm:$0xff] %v1211
  %1219 = vst [vmem:[#allocation3 + $0xd0] sm:$0xff] %v1213
  %v1220 = vld [vmem:[%s4] sm:$0xf]
  %v1221 = vld [vmem:[#allocation3] sm:$0xff]
  %v1222 = vld [vmem:[#allocation3 + $0x8] sm:$0xff]
  %v1223 = vld [vmem:[#allocation3 + $0x10] sm:$0xff]
  %v1224 = vld [vmem:[#allocation3 + $0x18] sm:$0xff]
  %v1225 = vld [vmem:[#allocation3 + $0x20] sm:$0xff]
  %v1226 = vld [vmem:[#allocation3 + $0x28] sm:$0xff]
  %v1227 = vld [vmem:[#allocation3 + $0x30] sm:$0xff]
  %v1228 = vld [vmem:[#allocation3 + $0x38] sm:$0xff]
  %v1229 = vld [vmem:[#allocation3 + $0x40] sm:$0xff]
  %v1230 = vld [vmem:[#allocation3 + $0x48] sm:$0xff]
  %v1231 = vld [vmem:[#allocation3 + $0x50] sm:$0xff]
  %v1232 = vld [vmem:[#allocation3 + $0x58] sm:$0xff]
  %v1233 = vld [vmem:[#allocation3 + $0x60] sm:$0xff]
  %v1234 = vld [vmem:[#allocation3 + $0x68] sm:$0xff]
  %v1235 = vld [vmem:[#allocation3 + $0x70] sm:$0xff]
  %v1236 = vld [vmem:[#allocation3 + $0x78] sm:$0xff]
  %v1237 = vld [vmem:[#allocation3 + $0x80] sm:$0xff]
  %v1238 = vld [vmem:[#allocation3 + $0x88] sm:$0xff]
  %v1239 = vld [vmem:[#allocation3 + $0x90] sm:$0xff]
  %v1240 = vld [vmem:[#allocation3 + $0x98] sm:$0xff]
  %v1241 = vld [vmem:[#allocation3 + $0xa0] sm:$0xff]
  %v1242 = vld [vmem:[#allocation3 + $0xa8] sm:$0xff]
  %v1243 = vld [vmem:[#allocation3 + $0xb0] sm:$0xff]
  %v1244 = vld [vmem:[#allocation3 + $0xb8] sm:$0xff]
  %v1245 = vld [vmem:[#allocation3 + $0xc0] sm:$0xff]
  %v1246 = vld [vmem:[#allocation3 + $0xc8] sm:$0xff]
  %v1247 = vld [vmem:[#allocation3 + $0xd0] sm:$0xff]
  %v1248 = vld [vmem:[%s5] sm:$0xff]
  %1250 = vset.pattern.permute.xlu0 0
  %1251 = vperm.xlu0 %1250, %v1248
  %v1252 = vpop.permute.xlu0 %1251
  %v1281 = vunpack.c.l.b16 %v1221
  %v1282 = vunpack.c.h.b16 %v1221
  %v1283 = vunpack.c.l.b16 %v1222
  %v1284 = vunpack.c.h.b16 %v1222
  %v1285 = vunpack.c.l.b16 %v1223
  %v1286 = vunpack.c.h.b16 %v1223
  %v1287 = vunpack.c.l.b16 %v1224
  %v1288 = vunpack.c.h.b16 %v1224
  %v1289 = vunpack.c.l.b16 %v1225
  %v1290 = vunpack.c.h.b16 %v1225
  %v1291 = vunpack.c.l.b16 %v1226
  %v1292 = vunpack.c.h.b16 %v1226
  %v1293 = vunpack.c.l.b16 %v1227
  %v1294 = vunpack.c.h.b16 %v1227
  %v1295 = vunpack.c.l.b16 %v1228
  %v1296 = vunpack.c.h.b16 %v1228
  %v1297 = vunpack.c.l.b16 %v1229
  %v1298 = vunpack.c.h.b16 %v1229
  %v1299 = vunpack.c.l.b16 %v1230
  %v1300 = vunpack.c.h.b16 %v1230
  %v1301 = vunpack.c.l.b16 %v1231
  %v1302 = vunpack.c.h.b16 %v1231
  %v1303 = vunpack.c.l.b16 %v1232
  %v1304 = vunpack.c.h.b16 %v1232
  %v1305 = vunpack.c.l.b16 %v1233
  %v1306 = vunpack.c.h.b16 %v1233
  %v1307 = vunpack.c.l.b16 %v1234
  %v1308 = vunpack.c.h.b16 %v1234
  %v1309 = vunpack.c.l.b16 %v1235
  %v1310 = vunpack.c.h.b16 %v1235
  %v1311 = vunpack.c.l.b16 %v1236
  %v1312 = vunpack.c.h.b16 %v1236
  %v1313 = vunpack.c.l.b16 %v1237
  %v1314 = vunpack.c.h.b16 %v1237
  %v1315 = vunpack.c.l.b16 %v1238
  %v1316 = vunpack.c.h.b16 %v1238
  %v1317 = vunpack.c.l.b16 %v1239
  %v1318 = vunpack.c.h.b16 %v1239
  %v1319 = vunpack.c.l.b16 %v1240
  %v1320 = vunpack.c.h.b16 %v1240
  %v1321 = vunpack.c.l.b16 %v1241
  %v1322 = vunpack.c.h.b16 %v1241
  %v1323 = vunpack.c.l.b16 %v1242
  %v1324 = vunpack.c.h.b16 %v1242
  %v1325 = vunpack.c.l.b16 %v1243
  %v1326 = vunpack.c.h.b16 %v1243
  %v1327 = vunpack.c.l.b16 %v1244
  %v1328 = vunpack.c.h.b16 %v1244
  %v1329 = vunpack.c.l.b16 %v1245
  %v1330 = vunpack.c.h.b16 %v1245
  %v1331 = vunpack.c.l.b16 %v1246
  %v1332 = vunpack.c.h.b16 %v1246
  %v1333 = vunpack.c.l.b16 %v1247
  %v1334 = vunpack.c.h.b16 %v1247
  %v1335 = vpack.c.b16 %v1287, %v1281
  %v1336 = vpack.c.b16 %v1288, %v1282
  %v1337 = vpack.c.b16 %v1289, %v1283
  %v1338 = vpack.c.b16 %v1290, %v1284
  %v1339 = vpack.c.b16 %v1291, %v1285
  %v1340 = vpack.c.b16 %v1292, %v1286
  %v1341 = vpack.c.b16 %v1299, %v1293
  %v1342 = vpack.c.b16 %v1300, %v1294
  %v1343 = vpack.c.b16 %v1301, %v1295
  %v1344 = vpack.c.b16 %v1302, %v1296
  %v1345 = vpack.c.b16 %v1303, %v1297
  %v1346 = vpack.c.b16 %v1304, %v1298
  %v1347 = vpack.c.b16 %v1311, %v1305
  %v1348 = vpack.c.b16 %v1312, %v1306
  %v1349 = vpack.c.b16 %v1313, %v1307
  %v1350 = vpack.c.b16 %v1314, %v1308
  %v1351 = vpack.c.b16 %v1315, %v1309
  %v1352 = vpack.c.b16 %v1316, %v1310
  %v1353 = vpack.c.b16 %v1323, %v1317
  %v1354 = vpack.c.b16 %v1324, %v1318
  %v1355 = vpack.c.b16 %v1325, %v1319
  %v1356 = vpack.c.b16 %v1326, %v1320
  %v1357 = vpack.c.b16 %v1327, %v1321
  %v1358 = vpack.c.b16 %v1328, %v1322
  %v1359 = vpack.c.b16 %v1329, %v1329
  %v1360 = vpack.c.b16 %v1330, %v1330
  %v1361 = vpack.c.b16 %v1331, %v1331
  %v1362 = vpack.c.b16 %v1332, %v1332
  %v1363 = vpack.c.b16 %v1333, %v1333
  %v1364 = vpack.c.b16 %v1334, %v1334
  %v1390 = vsel %vm501, %v1220, 0
  %v1393 = vsel %vm505, %v1359, 0
  %v1396 = vsel %vm505, %v1360, 0
  %v1399 = vsel %vm505, %v1361, 0
  %v1402 = vsel %vm505, %v1362, 0
  %v1405 = vsel %vm505, %v1363, 0
  %v1408 = vsel %vm505, %v1364, 0
  %1410 = vmatprep.subr.bf16.mxu0 %v1336
  %1411 = vmatpush1.bf16.msra.mxu0 %v1335
  %1412 = vmatprep.subr.bf16.mxu0 %v1342
  %1413 = vmatpush1.bf16.msra.mxu0 %v1341
  %1414 = vmatprep.subr.bf16.mxu0 %v1348
  %1415 = vmatpush1.bf16.msra.mxu0 %v1347
  %1416 = vmatprep.subr.bf16.mxu0 %v1354
  %1417 = vmatpush1.bf16.msra.mxu0 %v1353
  %1418 = vmatprep.subr.bf16.mxu0 %v1396
  %1419 = vmatpush1.bf16.msra.mxu0 %v1393
  %1420 = vmatprep.subr.bf16.mxu0 0
  %1421 = vmatpush1.bf16.msra.mxu0 0
  %1422 = vmatprep.subr.bf16.mxu0 0
  %1423 = vmatpush1.bf16.msra.mxu0 0
  %1424 = vmatprep.subr.bf16.mxu0 0
  %1425 = vmatpush1.bf16.msra.mxu0 0
  %1426 = vmatprep.subr.bf16.mxu0 0
  %1427 = vmatpush1.bf16.msra.mxu0 0
  %1428 = vmatprep.subr.bf16.mxu0 0
  %1429 = vmatpush1.bf16.msra.mxu0 0
  %1430 = vmatprep.subr.bf16.mxu0 0
  %1431 = vmatpush1.bf16.msra.mxu0 0
  %1432 = vmatprep.subr.bf16.mxu0 0
  %1433 = vmatpush1.bf16.msra.mxu0 0
  %1434 = vmatprep.subr.bf16.mxu0 0
  %1435 = vmatpush1.bf16.msra.mxu0 0
  %1436 = vmatprep.subr.bf16.mxu0 0
  %1437 = vmatpush1.bf16.msra.mxu0 0
  %1438 = vmatprep.subr.bf16.mxu0 0
  %1439 = vmatpush1.bf16.msra.mxu0 0
  %1440 = vmatprep.subr.bf16.mxu0 0
  %1441 = vmatpush1.bf16.msra.mxu0 0
  %1442 = vmatprep.mubr.bf16.mxu0 0
  %1443 = vmatmul.mubr.bf16.gmra.mrb[0].mxu0 %v1390
  %v1444 = vpop.f32.mrb[0].mxu0
  %v1445 = vadd.f32 %v1252, %v1444
  %v1446 = vpop.f32.mrb[0].mxu0
  %v1447 = vadd.f32 %v1252, %v1446
  %v1448 = vpop.f32.mrb[0].mxu0
  %v1449 = vpop.f32.mrb[0].mxu0
  %1450 = vdwg.mxu0
  %1451 = vmatprep.subr.bf16.mxu0 %v1338
  %1452 = vmatpush1.bf16.msra.mxu0 %v1337
  %1453 = vmatprep.subr.bf16.mxu0 %v1344
  %1454 = vmatpush1.bf16.msra.mxu0 %v1343
  %1455 = vmatprep.subr.bf16.mxu0 %v1350
  %1456 = vmatpush1.bf16.msra.mxu0 %v1349
  %1457 = vmatprep.subr.bf16.mxu0 %v1356
  %1458 = vmatpush1.bf16.msra.mxu0 %v1355
  %1459 = vmatprep.subr.bf16.mxu0 %v1402
  %1460 = vmatpush1.bf16.msra.mxu0 %v1399
  %1461 = vmatprep.subr.bf16.mxu0 0
  %1462 = vmatpush1.bf16.msra.mxu0 0
  %1463 = vmatprep.subr.bf16.mxu0 0
  %1464 = vmatpush1.bf16.msra.mxu0 0
  %1465 = vmatprep.subr.bf16.mxu0 0
  %1466 = vmatpush1.bf16.msra.mxu0 0
  %1467 = vmatprep.subr.bf16.mxu0 0
  %1468 = vmatpush1.bf16.msra.mxu0 0
  %1469 = vmatprep.subr.bf16.mxu0 0
  %1470 = vmatpush1.bf16.msra.mxu0 0
  %1471 = vmatprep.subr.bf16.mxu0 0
  %1472 = vmatpush1.bf16.msra.mxu0 0
  %1473 = vmatprep.subr.bf16.mxu0 0
  %1474 = vmatpush1.bf16.msra.mxu0 0
  %1475 = vmatprep.subr.bf16.mxu0 0
  %1476 = vmatpush1.bf16.msra.mxu0 0
  %1477 = vmatprep.subr.bf16.mxu0 0
  %1478 = vmatpush1.bf16.msra.mxu0 0
  %1479 = vmatprep.subr.bf16.mxu0 0
  %1480 = vmatpush1.bf16.msra.mxu0 0
  %1481 = vmatprep.subr.bf16.mxu0 0
  %1482 = vmatpush1.bf16.msra.mxu0 0
  %1483 = vmatprep.mubr.bf16.mxu0 0
  %1484 = vmatmul.mubr.bf16.gmra.mrb[0].mxu0 %v1390
  %v1485 = vpop.f32.mrb[0].mxu0
  %v1486 = vadd.f32 %v1252, %v1485
  %v1487 = vpop.f32.mrb[0].mxu0
  %v1488 = vadd.f32 %v1252, %v1487
  %v1489 = vpop.f32.mrb[0].mxu0
  %v1490 = vpop.f32.mrb[0].mxu0
  %1491 = vdwg.mxu0
  %1492 = vmatprep.subr.bf16.mxu0 %v1340
  %1493 = vmatpush1.bf16.msra.mxu0 %v1339
  %1494 = vmatprep.subr.bf16.mxu0 %v1346
  %1495 = vmatpush1.bf16.msra.mxu0 %v1345
  %1496 = vmatprep.subr.bf16.mxu0 %v1352
  %1497 = vmatpush1.bf16.msra.mxu0 %v1351
  %1498 = vmatprep.subr.bf16.mxu0 %v1358
  %1499 = vmatpush1.bf16.msra.mxu0 %v1357
  %1500 = vmatprep.subr.bf16.mxu0 %v1408
  %1501 = vmatpush1.bf16.msra.mxu0 %v1405
  %1502 = vmatprep.subr.bf16.mxu0 0
  %1503 = vmatpush1.bf16.msra.mxu0 0
  %1504 = vmatprep.subr.bf16.mxu0 0
  %1505 = vmatpush1.bf16.msra.mxu0 0
  %1506 = vmatprep.subr.bf16.mxu0 0
  %1507 = vmatpush1.bf16.msra.mxu0 0
  %1508 = vmatprep.subr.bf16.mxu0 0
  %1509 = vmatpush1.bf16.msra.mxu0 0
  %1510 = vmatprep.subr.bf16.mxu0 0
  %1511 = vmatpush1.bf16.msra.mxu0 0
  %1512 = vmatprep.subr.bf16.mxu0 0
  %1513 = vmatpush1.bf16.msra.mxu0 0
  %1514 = vmatprep.subr.bf16.mxu0 0
  %1515 = vmatpush1.bf16.msra.mxu0 0
  %1516 = vmatprep.subr.bf16.mxu0 0
  %1517 = vmatpush1.bf16.msra.mxu0 0
  %1518 = vmatprep.subr.bf16.mxu0 0
  %1519 = vmatpush1.bf16.msra.mxu0 0
  %1520 = vmatprep.subr.bf16.mxu0 0
  %1521 = vmatpush1.bf16.msra.mxu0 0
  %1522 = vmatprep.subr.bf16.mxu0 0
  %1523 = vmatpush1.bf16.msra.mxu0 0
  %1524 = vmatprep.mubr.bf16.mxu0 0
  %1525 = vmatmul.mubr.bf16.gmra.mrb[0].mxu0 %v1390
  %v1526 = vpop.f32.mrb[0].mxu0
  %v1527 = vadd.f32 %v1252, %v1526
  %v1528 = vpop.f32.mrb[0].mxu0
  %v1529 = vadd.f32 %v1252, %v1528
  %v1530 = vpop.f32.mrb[0].mxu0
  %v1531 = vpop.f32.mrb[0].mxu0
  %1532 = vdwg.mxu0
  %v1533 = vadd.f32 %v1445, %v844
  %v1534 = vadd.f32 %v1447, %v846
  %v1535 = vadd.f32 %v1486, %v885
  %v1536 = vadd.f32 %v1488, %v887
  %v1537 = vadd.f32 %v1527, %v926
  %v1538 = vadd.f32 %v1529, %v928
  %v1539 = vmax.f32 %v1533, 0.0
  %v1540 = vmax.f32 %v1534, 0.0
  %v1541 = vmax.f32 %v1535, 0.0
  %v1542 = vmax.f32 %v1536, 0.0
  %v1543 = vmax.f32 %v1537, 0.0
  %v1544 = vmax.f32 %v1538, 0.0
  %v1545 = vld [vmem:[%s1] sm:$0x3f]
  %v1547 = vlaneseq
  %v1548 = vshrl.u32 %v1547, 7
  %v1549 = vsub.s32 0, %v1548
  %v1550 = vrot.slane %v1545, %v1549
  %v1551 = vlaneseq
  %v1552 = vshrl.u32 %v1551, 7
  %v1553 = vsub.s32 1, %v1552
  %v1554 = vrot.slane %v1545, %v1553
  %v1555 = vlaneseq
  %v1556 = vshrl.u32 %v1555, 7
  %v1557 = vsub.s32 2, %v1556
  %v1558 = vrot.slane %v1545, %v1557
  %v1559 = vlaneseq
  %v1560 = vshrl.u32 %v1559, 7
  %v1561 = vsub.s32 3, %v1560
  %v1562 = vrot.slane %v1545, %v1561
  %v1563 = vlaneseq
  %v1564 = vshrl.u32 %v1563, 7
  %v1565 = vsub.s32 4, %v1564
  %v1566 = vrot.slane %v1545, %v1565
  %v1567 = vlaneseq
  %v1568 = vshrl.u32 %v1567, 7
  %v1569 = vsub.s32 5, %v1568
  %v1570 = vrot.slane %v1545, %v1569
  %v1577 = vmul.f32 %v1539, %v1550
  %v1578 = vmul.f32 %v1540, %v1554
  %v1579 = vmul.f32 %v1541, %v1558
  %v1580 = vmul.f32 %v1542, %v1562
  %v1581 = vmul.f32 %v1543, %v1566
  %v1582 = vmul.f32 %v1544, %v1570
  %v1583 = vpack.c.bf16 %v1577, %v1577
  %v1584 = vpack.c.bf16 %v1578, %v1578
  %v1585 = vpack.c.bf16 %v1579, %v1579
  %v1586 = vpack.c.bf16 %v1580, %v1580
  %v1587 = vpack.c.bf16 %v1581, %v1581
  %v1588 = vpack.c.bf16 %v1582, %v1582
  %v1595 = vunpack.c.l.b16 %v1583
  %v1596 = vunpack.c.l.b16 %v1584
  %v1597 = vunpack.c.l.b16 %v1585
  %v1598 = vunpack.c.l.b16 %v1586
  %v1599 = vunpack.c.l.b16 %v1587
  %v1600 = vunpack.c.l.b16 %v1588
  %v1601 = vpack.c.b16 %v1596, %v1595
  %v1602 = vpack.c.b16 %v1598, %v1597
  %v1603 = vpack.c.b16 %v1600, %v1599
  %1607 = vst [vmem:[%s8] sm:$0xff] %v1601
  %1608 = vst [vmem:[%s8 + $0x8] sm:$0xff] %v1602
  %1609 = vst [vmem:[%s8 + $0x10] sm:$0xff] %v1603
  // Predicated region
  $region34: #{_lambda_.2} parent=0 // pred_check
    _
  $region35: #{_lambda_.2} parent=0 // pred_check_branch
    %1611 = sbr.rel (0) target = $region37
  $region36: #{_lambda_.2} parent=0 // pred_region
    _
  $region37: #{_lambda_.2} parent=0 // pred_fallthru
    _
  // Predicated region
  $region38: #{_lambda_.2} parent=0 // pred_check
    _
  $region39: #{_lambda_.2} parent=0 // pred_check_branch
    %1613 = sbr.rel (0) target = $region41
  $region40: #{_lambda_.2} parent=0 // pred_region
    _
  $region41: #{_lambda_.2} parent=0 // pred_fallthru
    _

// kernel: _lambda_.3
$region0: #{_lambda_.3}
  #allocation0 [shape = 'u32[]', space=smem, size = 0x4, offset = 0x4, fixed_abs, tag = 'smem constant byte address 0x4 - core index']
  #allocation1 [shape = 'u32[144,128]{1,0:T(1,128)}', space=vmem, size = 0x12000, scoped, tag = 'internal scratch']
  #allocation2 [shape = 'bf16[16,288]{1,0:T(16,128)(2,1)}', space=vmem, size = 0x3000, scoped, tag = 'scratch operand']
  #allocation3 [shape = 'bf16[144,256]{1,0:T(16,128)(2,1)}', space=vmem, size = 0x12000, scoped, tag = 'scratch operand']
  %s0 = inlined_call_operand.vmem [shape: bf16[72,256], index: 0, kind: input, shape index: {}]
  %s1 = inlined_call_operand.vmem [shape: f32[1,256], index: 1, kind: input, shape index: {}]
  %s2 = inlined_call_operand.vmem [shape: bf16[16,72], index: 2, kind: input, shape index: {}]
  %s3 = inlined_call_operand.vmem [shape: f32[16,1], index: 3, kind: input, shape index: {}, may-alias: {3,5,7}]
  %s4 = inlined_call_operand.vmem [shape: bf16[16,144], index: 4, kind: input, shape index: {}]
  %s5 = inlined_call_operand.vmem [shape: f32[16,1], index: 5, kind: input, shape index: {}, may-alias: {3,5,7}]
  %s6 = inlined_call_operand.vmem [shape: bf16[16,8], index: 6, kind: input, shape index: {}]
  %s7 = inlined_call_operand.vmem [shape: f32[16,1], index: 7, kind: input, shape index: {}, may-alias: {3,5,7}]
  %s8 = inlined_call_operand.vmem [shape: bf16[16,256], index: 8, kind: output, shape index: {}]
  %s9 = sld [smem:[#allocation0]]
  $region42: #{_lambda_.3} parent=0
    _
  %s11 = ssub.s32 1, %s9
  %s12 = scalar_select 0, %s11, %s9
  // Predicated region
  $region2: #{_lambda_.3} parent=0 // pred_check
    _
  $region3: #{_lambda_.3} parent=0 // pred_check_branch
    %14 = sbr.rel (0) target = $region5
  $region4: #{_lambda_.3} parent=0 // pred_region
    _
  $region5: #{_lambda_.3} parent=0 // pred_fallthru
    _
  // Predicated region
  $region6: #{_lambda_.3} parent=0 // pred_check
    _
  $region7: #{_lambda_.3} parent=0 // pred_check_branch
    %16 = sbr.rel (0) target = $region9
  $region8: #{_lambda_.3} parent=0 // pred_region
    _
  $region9: #{_lambda_.3} parent=0 // pred_fallthru
    _
  // Predicated region
  $region10: #{_lambda_.3} parent=0 // pred_check
    _
  $region11: #{_lambda_.3} parent=0 // pred_check_branch
    %18 = sbr.rel (0) target = $region13
  $region12: #{_lambda_.3} parent=0 // pred_region
    _
  $region13: #{_lambda_.3} parent=0 // pred_fallthru
    _
  // Predicated region
  $region14: #{_lambda_.3} parent=0 // pred_check
    _
  $region15: #{_lambda_.3} parent=0 // pred_check_branch
    %20 = sbr.rel (0) target = $region17
  $region16: #{_lambda_.3} parent=0 // pred_region
    _
  $region17: #{_lambda_.3} parent=0 // pred_fallthru
    _
  // Predicated region
  $region18: #{_lambda_.3} parent=0 // pred_check
    _
  $region19: #{_lambda_.3} parent=0 // pred_check_branch
    %22 = sbr.rel (0) target = $region21
  $region20: #{_lambda_.3} parent=0 // pred_region
    _
  $region21: #{_lambda_.3} parent=0 // pred_fallthru
    _
  // Predicated region
  $region22: #{_lambda_.3} parent=0 // pred_check
    _
  $region23: #{_lambda_.3} parent=0 // pred_check_branch
    %24 = sbr.rel (0) target = $region25
  $region24: #{_lambda_.3} parent=0 // pred_region
    _
  $region25: #{_lambda_.3} parent=0 // pred_fallthru
    _
  // Predicated region
  $region26: #{_lambda_.3} parent=0 // pred_check
    _
  $region27: #{_lambda_.3} parent=0 // pred_check_branch
    %26 = sbr.rel (0) target = $region29
  $region28: #{_lambda_.3} parent=0 // pred_region
    _
  $region29: #{_lambda_.3} parent=0 // pred_fallthru
    _
  // Predicated region
  $region30: #{_lambda_.3} parent=0 // pred_check
    _
  $region31: #{_lambda_.3} parent=0 // pred_check_branch
    %28 = sbr.rel (0) target = $region33
  $region32: #{_lambda_.3} parent=0 // pred_region
    _
  $region33: #{_lambda_.3} parent=0 // pred_fallthru
    _
  %v30 = vld [vmem:[%s0] sm:$0xff]
  %v31 = vld [vmem:[%s0 + $0x8] sm:$0xff]
  %v32 = vld [vmem:[%s0 + $0x10] sm:$0xff]
  %v33 = vld [vmem:[%s0 + $0x18] sm:$0xff]
  %v34 = vld [vmem:[%s0 + $0x20] sm:$0xff]
  %v35 = vld [vmem:[%s0 + $0x28] sm:$0xff]
  %v36 = vld [vmem:[%s0 + $0x30] sm:$0xff]
  %v37 = vld [vmem:[%s0 + $0x38] sm:$0xff]
  %v38 = vld [vmem:[%s0 + $0x40] sm:$0xff]
  %v39 = vld [vmem:[%s0 + $0x20] sm:$0xff]
  %v40 = vld [vmem:[%s2] sm:$0xf]
  %v41 = vld [vmem:[%s2 + $0x4] sm:$0xf]
  %v42 = vld [vmem:[%s3] sm:$0xff]
  %v43 = vld [vmem:[%s3 + $0x8] sm:$0xff]
  %45 = vset.pattern.permute.xlu0 0
  %46 = vperm.xlu0 %45, %v42
  %v47 = vpop.permute.xlu0 %46
  %50 = vset.pattern.permute.xlu0 0
  %51 = vperm.xlu0 %50, %v43
  %v52 = vpop.permute.xlu0 %51
  %v56 = vunpack.c.l.b16 %v40
  %v57 = vunpack.c.l.b16 %v41
  %v58 = vpack.c.b16 %v57, %v56
  %v68 = vunpack.c.l.b16 %v30
  %v69 = vunpack.c.h.b16 %v30
  %v70 = vunpack.c.l.b16 %v31
  %v71 = vunpack.c.h.b16 %v31
  %v72 = vunpack.c.l.b16 %v32
  %v73 = vunpack.c.h.b16 %v32
  %v74 = vunpack.c.l.b16 %v33
  %v75 = vunpack.c.h.b16 %v33
  %v76 = vunpack.c.l.b16 %v34
  %v77 = vunpack.c.h.b16 %v34
  %v78 = vunpack.c.l.b16 %v35
  %v79 = vunpack.c.h.b16 %v35
  %v80 = vunpack.c.l.b16 %v36
  %v81 = vunpack.c.h.b16 %v36
  %v82 = vunpack.c.l.b16 %v37
  %v83 = vunpack.c.h.b16 %v37
  %v84 = vunpack.c.l.b16 %v38
  %v85 = vunpack.c.h.b16 %v38
  %v86 = vpack.c.b16 %v70, %v68
  %v87 = vpack.c.b16 %v71, %v69
  %v88 = vpack.c.b16 %v74, %v72
  %v89 = vpack.c.b16 %v75, %v73
  %v90 = vpack.c.b16 %v78, %v76
  %v91 = vpack.c.b16 %v79, %v77
  %v92 = vpack.c.b16 %v82, %v80
  %v93 = vpack.c.b16 %v83, %v81
  %v94 = vpack.c.b16 %v84, %v84
  %v95 = vpack.c.b16 %v85, %v85
  %vm104 = vcmask 588800
  %v106 = vsel %vm104, %v58, 0
  %vm108 = vcmask 1043456
  %v110 = vsel %vm108, %v94, 0
  %v113 = vsel %vm108, %v95, 0
  %115 = vmatprep.subr.bf16.mxu0 %v87
  %116 = vmatpush1.bf16.msra.mxu0 %v86
  %117 = vmatprep.subr.bf16.mxu0 %v89
  %118 = vmatpush1.bf16.msra.mxu0 %v88
  %119 = vmatprep.subr.bf16.mxu0 %v91
  %120 = vmatpush1.bf16.msra.mxu0 %v90
  %121 = vmatprep.subr.bf16.mxu0 %v93
  %122 = vmatpush1.bf16.msra.mxu0 %v92
  %123 = vmatprep.subr.bf16.mxu0 %v113
  %124 = vmatpush1.bf16.msra.mxu0 %v110
  %125 = vmatprep.subr.bf16.mxu0 0
  %126 = vmatpush1.bf16.msra.mxu0 0
  %127 = vmatprep.subr.bf16.mxu0 0
  %128 = vmatpush1.bf16.msra.mxu0 0
  %129 = vmatprep.subr.bf16.mxu0 0
  %130 = vmatpush1.bf16.msra.mxu0 0
  %131 = vmatprep.subr.bf16.mxu0 0
  %132 = vmatpush1.bf16.msra.mxu0 0
  %133 = vmatprep.subr.bf16.mxu0 0
  %134 = vmatpush1.bf16.msra.mxu0 0
  %135 = vmatprep.subr.bf16.mxu0 0
  %136 = vmatpush1.bf16.msra.mxu0 0
  %137 = vmatprep.subr.bf16.mxu0 0
  %138 = vmatpush1.bf16.msra.mxu0 0
  %139 = vmatprep.subr.bf16.mxu0 0
  %140 = vmatpush1.bf16.msra.mxu0 0
  %141 = vmatprep.subr.bf16.mxu0 0
  %142 = vmatpush1.bf16.msra.mxu0 0
  %143 = vmatprep.subr.bf16.mxu0 0
  %144 = vmatpush1.bf16.msra.mxu0 0
  %145 = vmatprep.subr.bf16.mxu0 0
  %146 = vmatpush1.bf16.msra.mxu0 0
  %147 = vmatprep.mubr.bf16.mxu0 0
  %148 = vmatmul.mubr.bf16.gmra.mrb[0].mxu0 %v106
  %v149 = vpop.f32.mrb[0].mxu0
  %v150 = vadd.f32 %v47, %v149
  %v151 = vpop.f32.mrb[0].mxu0
  %v152 = vadd.f32 %v47, %v151
  %v153 = vpop.f32.mrb[0].mxu0
  %v154 = vadd.f32 %v52, %v153
  %v155 = vpop.f32.mrb[0].mxu0
  %v156 = vadd.f32 %v52, %v155
  %157 = vdwg.mxu0
  %v158 = vmax.f32 %v150, 0.0
  %v159 = vmax.f32 %v152, 0.0
  %v160 = vmax.f32 %v154, 0.0
  %v161 = vmax.f32 %v156, 0.0
  %v162 = vld [vmem:[%s1] sm:$0x3]
  %v164 = vlaneseq
  %v165 = vshrl.u32 %v164, 7
  %v166 = vsub.s32 0, %v165
  %v167 = vrot.slane %v162, %v166
  %v168 = vlaneseq
  %v169 = vshrl.u32 %v168, 7
  %v170 = vsub.s32 1, %v169
  %v171 = vrot.slane %v162, %v170
  %v174 = vmul.f32 %v158, %v167
  %v175 = vmul.f32 %v159, %v171
  %v176 = vmul.f32 %v160, %v167
  %v177 = vmul.f32 %v161, %v171
  %v178 = vpack.c.bf16 %v176, %v174
  %v179 = vpack.c.bf16 %v177, %v175
  %vm180 = vcmask 130048
  %181 = vst.msk [vmem:[#allocation2] sm:$0xff] %vm180, 0
  %vm182 = vcmask 261248
  %183 = vst.msk [vmem:[#allocation2 + $0x10] sm:$0xff] %vm182, 0
  %186 = vrot.lane.b32.xlu0 %v178, 16
  %v187 = vpop.permute.xlu0 %186
  %188 = vrot.lane.b32.xlu0 %v179, 16
  %v189 = vpop.permute.xlu0 %188
  %vm190 = vcmask 130048
  %v191 = vsel %vm190, %v187, %v189
  %vm195 = vcmask 1047680
  %196 = vst.msk [vmem:[#allocation2] sm:$0xff] %vm195, %v187
  %197 = vst [vmem:[#allocation2 + $0x8] sm:$0xff] %v191
  %198 = vst.msk [vmem:[#allocation2 + $0x10] sm:$0xff] %vm180, %v189
  %v199 = vld [vmem:[%s6] sm:$0xf]
  %v200 = vld [vmem:[%s6 + $0x4] sm:$0xf]
  %v201 = vld [vmem:[%s7] sm:$0xff]
  %v202 = vld [vmem:[%s7 + $0x8] sm:$0xff]
  %204 = vset.pattern.permute.xlu0 0
  %205 = vperm.xlu0 %204, %v201
  %v206 = vpop.permute.xlu0 %205
  %209 = vset.pattern.permute.xlu0 0
  %210 = vperm.xlu0 %209, %v202
  %v211 = vpop.permute.xlu0 %210
  %v215 = vunpack.c.l.b16 %v199
  %v216 = vunpack.c.l.b16 %v200
  %v217 = vpack.c.b16 %v216, %v215
  %v219 = vunpack.c.l.b16 %v39
  %v220 = vunpack.c.h.b16 %v39
  %v221 = vpack.c.b16 %v219, %v219
  %v222 = vpack.c.b16 %v220, %v220
  %vm223 = vcmask 64512
  %v225 = vsel %vm223, %v217, 0
  %v228 = vsel %vm108, %v221, 0
  %v231 = vsel %vm108, %v222, 0
  %233 = vmatprep.subr.bf16.mxu0 %v231
  %234 = vmatpush1.bf16.msra.mxu0 %v228
  %235 = vmatprep.subr.bf16.mxu0 0
  %236 = vmatpush1.bf16.msra.mxu0 0
  %237 = vmatprep.subr.bf16.mxu0 0
  %238 = vmatpush1.bf16.msra.mxu0 0
  %239 = vmatprep.subr.bf16.mxu0 0
  %240 = vmatpush1.bf16.msra.mxu0 0
  %241 = vmatprep.subr.bf16.mxu0 0
  %242 = vmatpush1.bf16.msra.mxu0 0
  %243 = vmatprep.subr.bf16.mxu0 0
  %244 = vmatpush1.bf16.msra.mxu0 0
  %245 = vmatprep.subr.bf16.mxu0 0
  %246 = vmatpush1.bf16.msra.mxu0 0
  %247 = vmatprep.subr.bf16.mxu0 0
  %248 = vmatpush1.bf16.msra.mxu0 0
  %249 = vmatprep.subr.bf16.mxu0 0
  %250 = vmatpush1.bf16.msra.mxu0 0
  %251 = vmatprep.subr.bf16.mxu0 0
  %252 = vmatpush1.bf16.msra.mxu0 0
  %253 = vmatprep.subr.bf16.mxu0 0
  %254 = vmatpush1.bf16.msra.mxu0 0
  %255 = vmatprep.subr.bf16.mxu0 0
  %256 = vmatpush1.bf16.msra.mxu0 0
  %257 = vmatprep.subr.bf16.mxu0 0
  %258 = vmatpush1.bf16.msra.mxu0 0
  %259 = vmatprep.subr.bf16.mxu0 0
  %260 = vmatpush1.bf16.msra.mxu0 0
  %261 = vmatprep.subr.bf16.mxu0 0
  %262 = vmatpush1.bf16.msra.mxu0 0
  %263 = vmatprep.subr.bf16.mxu0 0
  %264 = vmatpush1.bf16.msra.mxu0 0
  %265 = vmatprep.mubr.bf16.mxu0 0
  %266 = vmatmul.mubr.bf16.gmra.mrb[0].mxu0 %v225
  %v267 = vpop.f32.mrb[0].mxu0
  %v268 = vadd.f32 %v206, %v267
  %v269 = vpop.f32.mrb[0].mxu0
  %v270 = vadd.f32 %v206, %v269
  %v271 = vpop.f32.mrb[0].mxu0
  %v272 = vadd.f32 %v211, %v271
  %v273 = vpop.f32.mrb[0].mxu0
  %v274 = vadd.f32 %v211, %v273
  %275 = vdwg.mxu0
  %v276 = vld [vmem:[#allocation2] sm:$0xff]
  %v277 = vld [vmem:[#allocation2 + $0x8] sm:$0xff]
  %v278 = vld [vmem:[#allocation2 + $0x10] sm:$0xff]
  %282 = vrot.lane.b32.xlu0 %v276, 123
  %v283 = vpop.permute.xlu0 %282
  %284 = vrot.lane.b32.xlu0 %v277, 123
  %v285 = vpop.permute.xlu0 %284
  %286 = vrot.lane.b32.xlu0 %v278, 123
  %v287 = vpop.permute.xlu0 %286
  %vm288 = vcmask 1006592
  %v289 = vsel %vm288, %v283, %v285
  %v290 = vsel %vm288, %v285, %v287
  %293 = vst [vmem:[#allocation3] sm:$0xff] %v289
  %294 = vst [vmem:[#allocation3 + $0x8] sm:$0xff] %v290
  %v295 = vld [vmem:[#allocation2] sm:$0xff]
  %v296 = vld [vmem:[#allocation2 + $0x8] sm:$0xff]
  %v297 = vld [vmem:[#allocation2 + $0x10] sm:$0xff]
  %301 = vrot.lane.b32.xlu0 %v295, 122
  %v302 = vpop.permute.xlu0 %301
  %303 = vrot.lane.b32.xlu0 %v296, 122
  %v304 = vpop.permute.xlu0 %303
  %305 = vrot.lane.b32.xlu0 %v297, 122
  %v306 = vpop.permute.xlu0 %305
  %vm307 = vcmask 998400
  %v308 = vsel %vm307, %v302, %v304
  %v309 = vsel %vm307, %v304, %v306
  %312 = vst [vmem:[#allocation3 + $0x10] sm:$0xff] %v308
  %313 = vst [vmem:[#allocation3 + $0x18] sm:$0xff] %v309
  %v314 = vld [vmem:[#allocation2] sm:$0xff]
  %v315 = vld [vmem:[#allocation2 + $0x8] sm:$0xff]
  %v316 = vld [vmem:[#allocation2 + $0x10] sm:$0xff]
  %320 = vrot.lane.b32.xlu0 %v314, 121
  %v321 = vpop.permute.xlu0 %320
  %322 = vrot.lane.b32.xlu0 %v315, 121
  %v323 = vpop.permute.xlu0 %322
  %324 = vrot.lane.b32.xlu0 %v316, 121
  %v325 = vpop.permute.xlu0 %324
  %vm326 = vcmask 990208
  %v327 = vsel %vm326, %v321, %v323
  %v328 = vsel %vm326, %v323, %v325
  %331 = vst [vmem:[#allocation3 + $0x20] sm:$0xff] %v327
  %332 = vst [vmem:[#allocation3 + $0x28] sm:$0xff] %v328
  %v333 = vld [vmem:[#allocation2] sm:$0xff]
  %v334 = vld [vmem:[#allocation2 + $0x8] sm:$0xff]
  %v335 = vld [vmem:[#allocation2 + $0x10] sm:$0xff]
  %339 = vrot.lane.b32.xlu0 %v333, 113
  %v340 = vpop.permute.xlu0 %339
  %341 = vrot.lane.b32.xlu0 %v334, 113
  %v342 = vpop.permute.xlu0 %341
  %343 = vrot.lane.b32.xlu0 %v335, 113
  %v344 = vpop.permute.xlu0 %343
  %vm345 = vcmask 924672
  %v346 = vsel %vm345, %v340, %v342
  %v347 = vsel %vm345, %v342, %v344
  %350 = vst [vmem:[#allocation3 + $0x30] sm:$0xff] %v346
  %351 = vst [vmem:[#allocation3 + $0x38] sm:$0xff] %v347
  %v352 = vld [vmem:[#allocation2] sm:$0xff]
  %v353 = vld [vmem:[#allocation2 + $0x8] sm:$0xff]
  %v354 = vld [vmem:[#allocation2 + $0x10] sm:$0xff]
  %358 = vrot.lane.b32.xlu0 %v352, 112
  %v359 = vpop.permute.xlu0 %358
  %360 = vrot.lane.b32.xlu0 %v353, 112
  %v361 = vpop.permute.xlu0 %360
  %362 = vrot.lane.b32.xlu0 %v354, 112
  %v363 = vpop.permute.xlu0 %362
  %vm364 = vcmask 916480
  %v365 = vsel %vm364, %v359, %v361
  %v366 = vsel %vm364, %v361, %v363
  %369 = vst [vmem:[#allocation3 + $0x40] sm:$0xff] %v365
  %370 = vst [vmem:[#allocation3 + $0x48] sm:$0xff] %v366
  %v371 = vld [vmem:[#allocation2] sm:$0xff]
  %v372 = vld [vmem:[#allocation2 + $0x8] sm:$0xff]
  %v373 = vld [vmem:[#allocation2 + $0x10] sm:$0xff]
  %377 = vrot.lane.b32.xlu0 %v371, 111
  %v378 = vpop.permute.xlu0 %377
  %379 = vrot.lane.b32.xlu0 %v372, 111
  %v380 = vpop.permute.xlu0 %379
  %381 = vrot.lane.b32.xlu0 %v373, 111
  %v382 = vpop.permute.xlu0 %381
  %vm383 = vcmask 908288
  %v384 = vsel %vm383, %v378, %v380
  %v385 = vsel %vm383, %v380, %v382
  %388 = vst [vmem:[#allocation3 + $0x50] sm:$0xff] %v384
  %389 = vst [vmem:[#allocation3 + $0x58] sm:$0xff] %v385
  %v390 = vld [vmem:[#allocation2] sm:$0xff]
  %v391 = vld [vmem:[#allocation2 + $0x8] sm:$0xff]
  %v392 = vld [vmem:[#allocation2 + $0x10] sm:$0xff]
  %396 = vrot.lane.b32.xlu0 %v390, 103
  %v397 = vpop.permute.xlu0 %396
  %398 = vrot.lane.b32.xlu0 %v391, 103
  %v399 = vpop.permute.xlu0 %398
  %400 = vrot.lane.b32.xlu0 %v392, 103
  %v401 = vpop.permute.xlu0 %400
  %vm402 = vcmask 842752
  %v403 = vsel %vm402, %v397, %v399
  %v404 = vsel %vm402, %v399, %v401
  %407 = vst [vmem:[#allocation3 + $0x60] sm:$0xff] %v403
  %408 = vst [vmem:[#allocation3 + $0x68] sm:$0xff] %v404
  %v409 = vld [vmem:[#allocation2] sm:$0xff]
  %v410 = vld [vmem:[#allocation2 + $0x8] sm:$0xff]
  %v411 = vld [vmem:[#allocation2 + $0x10] sm:$0xff]
  %415 = vrot.lane.b32.xlu0 %v409, 102
  %v416 = vpop.permute.xlu0 %415
  %417 = vrot.lane.b32.xlu0 %v410, 102
  %v418 = vpop.permute.xlu0 %417
  %419 = vrot.lane.b32.xlu0 %v411, 102
  %v420 = vpop.permute.xlu0 %419
  %vm421 = vcmask 834560
  %v422 = vsel %vm421, %v416, %v418
  %v423 = vsel %vm421, %v418, %v420
  %426 = vst [vmem:[#allocation3 + $0x70] sm:$0xff] %v422
  %427 = vst [vmem:[#allocation3 + $0x78] sm:$0xff] %v423
  %v428 = vld [vmem:[#allocation2] sm:$0xff]
  %v429 = vld [vmem:[#allocation2 + $0x8] sm:$0xff]
  %v430 = vld [vmem:[#allocation2 + $0x10] sm:$0xff]
  %434 = vrot.lane.b32.xlu0 %v428, 101
  %v435 = vpop.permute.xlu0 %434
  %436 = vrot.lane.b32.xlu0 %v429, 101
  %v437 = vpop.permute.xlu0 %436
  %438 = vrot.lane.b32.xlu0 %v430, 101
  %v439 = vpop.permute.xlu0 %438
  %vm440 = vcmask 826368
  %v441 = vsel %vm440, %v435, %v437
  %v442 = vsel %vm440, %v437, %v439
  %445 = vst [vmem:[#allocation3 + $0x80] sm:$0xff] %v441
  %446 = vst [vmem:[#allocation3 + $0x88] sm:$0xff] %v442
  %v447 = vld [vmem:[%s4] sm:$0xff]
  %v448 = vld [vmem:[%s4 + $0x8] sm:$0xff]
  %v449 = vld [vmem:[#allocation3] sm:$0xff]
  %v450 = vld [vmem:[#allocation3 + $0x8] sm:$0xff]
  %v451 = vld [vmem:[#allocation3 + $0x10] sm:$0xff]
  %v452 = vld [vmem:[#allocation3 + $0x18] sm:$0xff]
  %v453 = vld [vmem:[#allocation3 + $0x20] sm:$0xff]
  %v454 = vld [vmem:[#allocation3 + $0x28] sm:$0xff]
  %v455 = vld [vmem:[#allocation3 + $0x30] sm:$0xff]
  %v456 = vld [vmem:[#allocation3 + $0x38] sm:$0xff]
  %v457 = vld [vmem:[#allocation3 + $0x40] sm:$0xff]
  %v458 = vld [vmem:[#allocation3 + $0x48] sm:$0xff]
  %v459 = vld [vmem:[#allocation3 + $0x50] sm:$0xff]
  %v460 = vld [vmem:[#allocation3 + $0x58] sm:$0xff]
  %v461 = vld [vmem:[#allocation3 + $0x60] sm:$0xff]
  %v462 = vld [vmem:[#allocation3 + $0x68] sm:$0xff]
  %v463 = vld [vmem:[#allocation3 + $0x70] sm:$0xff]
  %v464 = vld [vmem:[#allocation3 + $0x78] sm:$0xff]
  %v465 = vld [vmem:[#allocation3 + $0x80] sm:$0xff]
  %v466 = vld [vmem:[#allocation3 + $0x88] sm:$0xff]
  %v467 = vld [vmem:[%s5] sm:$0xff]
  %v468 = vld [vmem:[%s5 + $0x8] sm:$0xff]
  %470 = vset.pattern.permute.xlu0 0
  %471 = vperm.xlu0 %470, %v467
  %v472 = vpop.permute.xlu0 %471
  %475 = vset.pattern.permute.xlu0 0
  %476 = vperm.xlu0 %475, %v468
  %v477 = vpop.permute.xlu0 %476
  %v481 = vunpack.c.l.b16 %v447
  %v482 = vunpack.c.h.b16 %v447
  %v483 = vunpack.c.l.b16 %v448
  %v484 = vunpack.c.h.b16 %v448
  %v485 = vpack.c.b16 %v483, %v481
  %v486 = vpack.c.b16 %v484, %v482
  %v489 = vsel %vm180, %v486, 0
  %491 = vmatprep.subr.bf16.mxu0 %v450
  %492 = vmatpush1.bf16.msra.mxu0 %v449
  %493 = vmatprep.subr.bf16.mxu0 %v452
  %494 = vmatpush1.bf16.msra.mxu0 %v451
  %495 = vmatprep.subr.bf16.mxu0 %v454
  %496 = vmatpush1.bf16.msra.mxu0 %v453
  %497 = vmatprep.subr.bf16.mxu0 %v456
  %498 = vmatpush1.bf16.msra.mxu0 %v455
  %499 = vmatprep.subr.bf16.mxu0 %v458
  %500 = vmatpush1.bf16.msra.mxu0 %v457
  %501 = vmatprep.subr.bf16.mxu0 %v460
  %502 = vmatpush1.bf16.msra.mxu0 %v459
  %503 = vmatprep.subr.bf16.mxu0 %v462
  %504 = vmatpush1.bf16.msra.mxu0 %v461
  %505 = vmatprep.subr.bf16.mxu0 %v464
  %506 = vmatpush1.bf16.msra.mxu0 %v463
  %507 = vmatprep.subr.bf16.mxu0 %v466
  %508 = vmatpush1.bf16.msra.mxu0 %v465
  %509 = vmatprep.subr.bf16.mxu0 0
  %510 = vmatpush1.bf16.msra.mxu0 0
  %511 = vmatprep.subr.bf16.mxu0 0
  %512 = vmatpush1.bf16.msra.mxu0 0
  %513 = vmatprep.subr.bf16.mxu0 0
  %514 = vmatpush1.bf16.msra.mxu0 0
  %515 = vmatprep.subr.bf16.mxu0 0
  %516 = vmatpush1.bf16.msra.mxu0 0
  %517 = vmatprep.subr.bf16.mxu0 0
  %518 = vmatpush1.bf16.msra.mxu0 0
  %519 = vmatprep.subr.bf16.mxu0 0
  %520 = vmatpush1.bf16.msra.mxu0 0
  %521 = vmatprep.subr.bf16.mxu0 0
  %522 = vmatpush1.bf16.msra.mxu0 0
  %523 = vmatprep.mubr.bf16.mxu0 %v489
  %524 = vmatmul.mubr.bf16.gmra.mrb[0].mxu0 %v485
  %v525 = vpop.f32.mrb[0].mxu0
  %v526 = vadd.f32 %v472, %v525
  %v527 = vpop.f32.mrb[0].mxu0
  %v528 = vadd.f32 %v472, %v527
  %v529 = vpop.f32.mrb[0].mxu0
  %v530 = vadd.f32 %v477, %v529
  %v531 = vpop.f32.mrb[0].mxu0
  %v532 = vadd.f32 %v477, %v531
  %533 = vdwg.mxu0
  %v534 = vadd.f32 %v526, %v268
  %v535 = vadd.f32 %v528, %v270
  %v536 = vadd.f32 %v530, %v272
  %v537 = vadd.f32 %v532, %v274
  %v538 = vmax.f32 %v534, 0.0
  %v539 = vmax.f32 %v535, 0.0
  %v540 = vmax.f32 %v536, 0.0
  %v541 = vmax.f32 %v537, 0.0
  %v542 = vld [vmem:[%s1] sm:$0x3]
  %v544 = vlaneseq
  %v545 = vshrl.u32 %v544, 7
  %v546 = vsub.s32 0, %v545
  %v547 = vrot.slane %v542, %v546
  %v548 = vlaneseq
  %v549 = vshrl.u32 %v548, 7
  %v550 = vsub.s32 1, %v549
  %v551 = vrot.slane %v542, %v550
  %v554 = vmul.f32 %v538, %v547
  %v555 = vmul.f32 %v539, %v551
  %v556 = vmul.f32 %v540, %v547
  %v557 = vmul.f32 %v541, %v551
  %v558 = vpack.c.bf16 %v556, %v554
  %v559 = vpack.c.bf16 %v557, %v555
  %v562 = vunpack.c.l.b16 %v558
  %v563 = vunpack.c.l.b16 %v559
  %v564 = vunpack.c.h.b16 %v558
  %v565 = vunpack.c.h.b16 %v559
  %v566 = vpack.c.b16 %v563, %v562
  %v567 = vpack.c.b16 %v565, %v564
  %570 = vst [vmem:[%s8] sm:$0xff] %v566
  %571 = vst [vmem:[%s8 + $0x8] sm:$0xff] %v567
  // Predicated region
  $region34: #{_lambda_.3} parent=0 // pred_check
    _
  $region35: #{_lambda_.3} parent=0 // pred_check_branch
    %573 = sbr.rel (0) target = $region37
  $region36: #{_lambda_.3} parent=0 // pred_region
    _
  $region37: #{_lambda_.3} parent=0 // pred_fallthru
    _
  // Predicated region
  $region38: #{_lambda_.3} parent=0 // pred_check
    _
  $region39: #{_lambda_.3} parent=0 // pred_check_branch
    %575 = sbr.rel (0) target = $region41
  $region40: #{_lambda_.3} parent=0 // pred_region
    _
  $region41: #{_lambda_.3} parent=0 // pred_fallthru
    _

</llo_original>
